<compile_context>
chip_gen: v7x
topology: tpu7x:2x2x1
jax: 0.10.0
libtpu: 0.0.40
codegen_flags: <defaults>
</compile_context>

<pallas_src>
import math
import numpy as np
import jax
import jax.numpy as jnp
from jax import lax
from jax.experimental import pallas as pl
from jax.experimental.pallas import tpu as pltpu

D_MODEL = 4
NUM_HEADS = 2
D_HEAD = D_MODEL // NUM_HEADS


def mha_kernel(q_ref, k_ref, v_ref, wb_ref, out_ref, attn_ref):
    # q_ref/k_ref/v_ref : (B, S, D)
    # wb_ref            : (4, D+1, D) packed [W ; b] slabs (Q, K, V, O order);
    #                     W is (in, out) with heads fused along out, and the
    #                     1/sqrt(d) scale already folded into the Q slab.
    # out_ref           : (B, S, D)    final projection
    # attn_ref          : (B, H, S, S) softmax attention weights
    B, S, D = q_ref.shape
    H = attn_ref.shape[1]
    d = D // H

    wb = wb_ref[...]                      # single load; static slices below
    Wq, bq = wb[0, :D, :], wb[0, D:, :]   # (D, D), (1, D)
    Wk, bk = wb[1, :D, :], wb[1, D:, :]
    Wv, bv = wb[2, :D, :], wb[2, D:, :]
    Wo, bo = wb[3, :D, :], wb[3, D:, :]

    for b in range(B):                    # B tiny & static -> unrolled
        # Fused (all-heads) projections: 3 matmuls instead of 3*H, no .T.
        Q = jnp.dot(q_ref[b], Wq, preferred_element_type=jnp.float32) + bq
        K = jnp.dot(k_ref[b], Wk, preferred_element_type=jnp.float32) + bk
        V = jnp.dot(v_ref[b], Wv, preferred_element_type=jnp.float32) + bv

        head_outs = []
        for h in range(H):                # H tiny & static -> unrolled
            Qh = Q[:, h * d:(h + 1) * d]
            Kh = K[:, h * d:(h + 1) * d]
            Vh = V[:, h * d:(h + 1) * d]
            # Contract last dims of Qh/Kh (scale already folded into Q).
            scores = lax.dot_general(Qh, Kh, (((1,), (1,)), ((), ())),
                                     preferred_element_type=jnp.float32)
            scores = scores - jnp.max(scores, axis=-1, keepdims=True)
            e = jnp.exp(scores)
            attn = e * pl.reciprocal(jnp.sum(e, axis=-1, keepdims=True),
                                     approx=True)
            attn_ref[b, h] = attn.astype(attn_ref.dtype)
            head_outs.append(jnp.dot(attn, Vh,
                                     preferred_element_type=jnp.float32))

        concat = jnp.concatenate(head_outs, axis=-1)        # (S, D)
        proj = jnp.dot(concat, Wo, preferred_element_type=jnp.float32) + bo
        out_ref[b] = proj.astype(out_ref.dtype)


def pack_params(params):
    """Pack nn.Linear-layout params into one kernel slab (4, D+1, D).

    - heads fused along the output axis: W*[:, h*d:(h+1)*d] = w*[h].T
    - pre-transposed to (in, out) so the kernel does x @ W (no in-kernel .T)
    - the 1/sqrt(d) attention scale is folded into Wq / bq
    """
    wq, bq, wk, bk, wv, bv, wo, bo = params
    H, d, D = wq.shape
    scale = 1.0 / math.sqrt(d)

    def fuse(w, b):  # (H, d, D), (H, d) -> (D, H*d), (H*d,)
        return jnp.reshape(w, (H * d, D)).T, jnp.reshape(b, (H * d,))

    Wq, Bq = fuse(wq, bq)
    Wq, Bq = Wq * scale, Bq * scale
    Wk, Bk = fuse(wk, bk)
    Wv, Bv = fuse(wv, bv)
    Wo, Bo = wo.T, bo

    slabs = [jnp.concatenate([W, B[None, :]], axis=0)       # (D+1, D)
             for W, B in ((Wq, Bq), (Wk, Bk), (Wv, Bv), (Wo, Bo))]
    return jnp.stack(slabs, axis=0)                         # (4, D+1, D)


def multi_head_attention(pre_q, pre_k, pre_v, params):
    """pre_q/k/v: [B, S, D].  Returns (projection [B,S,D], attn [B,H,S,S])."""
    B, S, D = pre_q.shape
    H = NUM_HEADS
    wb = pack_params(params)

    vmem_spec = pl.BlockSpec(memory_space=pltpu.MemorySpace.VMEM)
    out_shapes = (
        jax.ShapeDtypeStruct((B, S, D), pre_q.dtype),
        jax.ShapeDtypeStruct((B, H, S, S), jnp.float32),
    )
    # Single invocation (no grid): whole problem (<10 KiB) lives in VMEM.
    return pl.pallas_call(
        mha_kernel,
        out_shape=out_shapes,
        in_specs=[vmem_spec, vmem_spec, vmem_spec, vmem_spec],
        out_specs=(vmem_spec, vmem_spec),
    )(pre_q, pre_k, pre_v, wb)


def init_params(key):
    """Deterministic init matching nn.Linear shapes (uniform +/- 1/sqrt(fan_in))."""
    H, d, D = NUM_HEADS, D_HEAD, D_MODEL
    ks = jax.random.split(key, 8)
    bound = 1.0 / math.sqrt(D)
    u = lambda k, shape: jax.random.uniform(k, shape, jnp.float32, -bound, bound)
    wq = u(ks[0], (H, d, D))   # per-head nn.Linear weight (out, in)
    bq = u(ks[1], (H, d))
    wk = u(ks[2], (H, d, D))
    bk = u(ks[3], (H, d))
    wv = u(ks[4], (H, d, D))
    bv = u(ks[5], (H, d))
    wo = u(ks[6], (D, D))
    bo = u(ks[7], (D,))
    return (wq, bq, wk, bk, wv, bv, wo, bo)


def reference_forward(pre_q, pre_k, pre_v, params):
    """Plain-JAX mirror of the PyTorch forward (eval mode, mask=None)."""
    wq, bq, wk, bk, wv, bv, wo, bo = params
    outs, attns = [], []
    for h in range(NUM_HEADS):
        Q = pre_q @ wq[h].T + bq[h]
        K = pre_k @ wk[h].T + bk[h]
        V = pre_v @ wv[h].T + bv[h]
        scores = (Q @ jnp.swapaxes(K, -1, -2)) / math.sqrt(D_HEAD)
        attn = jax.nn.softmax(scores, axis=-1)
        outs.append(attn @ V)
        attns.append(attn)
    concat = jnp.concatenate(outs, axis=-1)
    proj = concat @ wo.T + bo
    attn_w = jnp.stack(attns, axis=1)  # [B, H, S, S]
    return proj, attn_w


if __name__ == "__main__":
    B, S = 2, 8
    key = jax.random.PRNGKey(0)
    k_q, k_k, k_v, k_p = jax.random.split(key, 4)
    pre_q = jax.random.normal(k_q, (B, S, D_MODEL), jnp.float32)
    pre_k = jax.random.normal(k_k, (B, S, D_MODEL), jnp.float32)
    pre_v = jax.random.normal(k_v, (B, S, D_MODEL), jnp.float32)
    params = init_params(k_p)

    proj, attn = multi_head_attention(pre_q, pre_k, pre_v, params)
    proj = jax.block_until_ready(proj)
    attn = jax.block_until_ready(attn)

    ref_proj, ref_attn = reference_forward(pre_q, pre_k, pre_v, params)
    # Tolerance relaxed slightly because the softmax denominator uses the
    # approximate EUP reciprocal (pl.reciprocal(..., approx=True)).
    np.testing.assert_allclose(np.asarray(proj), np.asarray(ref_proj),
                               rtol=2e-3, atol=2e-3)
    np.testing.assert_allclose(np.asarray(attn), np.asarray(ref_attn),
                               rtol=2e-3, atol=2e-3)
    print("KERNEL_OK")
</pallas_src>

<mosaic_0001>
module attributes {stable_mosaic.version = 11 : i64} {
  func.func @mha_kernel(%arg0: memref<2x8x4xf32, #tpu.memory_space<vmem>>, %arg1: memref<2x8x4xf32, #tpu.memory_space<vmem>>, %arg2: memref<2x8x4xf32, #tpu.memory_space<vmem>>, %arg3: memref<4x5x4xf32, #tpu.memory_space<vmem>>, %arg4: memref<2x8x4xf32, #tpu.memory_space<vmem>>, %arg5: memref<2x2x8x8xf32, #tpu.memory_space<vmem>>) attributes {dimension_semantics = [], scalar_prefetch = 0 : i64, scratch_operands = 0 : i64, tpu.core_type = #tpu.core_type<tc>} {
    %c0 = arith.constant 0 : index
    %c0_0 = arith.constant 0 : index
    %c0_1 = arith.constant 0 : index
    %0 = vector.load %arg3[%c0, %c0_0, %c0_1] : memref<4x5x4xf32, #tpu.memory_space<vmem>>, vector<4x5x4xf32>
    %1 = vector.extract_strided_slice %0 {offsets = [0, 0, 0], sizes = [1, 4, 4], strides = [1, 1, 1]} : vector<4x5x4xf32> to vector<1x4x4xf32>
    %2 = vector.shape_cast %1 : vector<1x4x4xf32> to vector<4x4xf32>
    %3 = vector.extract_strided_slice %0 {offsets = [0, 4, 0], sizes = [1, 1, 4], strides = [1, 1, 1]} : vector<4x5x4xf32> to vector<1x1x4xf32>
    %4 = vector.shape_cast %3 : vector<1x1x4xf32> to vector<1x4xf32>
    %5 = vector.extract_strided_slice %0 {offsets = [1, 0, 0], sizes = [1, 4, 4], strides = [1, 1, 1]} : vector<4x5x4xf32> to vector<1x4x4xf32>
    %6 = vector.shape_cast %5 : vector<1x4x4xf32> to vector<4x4xf32>
    %7 = vector.extract_strided_slice %0 {offsets = [1, 4, 0], sizes = [1, 1, 4], strides = [1, 1, 1]} : vector<4x5x4xf32> to vector<1x1x4xf32>
    %8 = vector.shape_cast %7 : vector<1x1x4xf32> to vector<1x4xf32>
    %9 = vector.extract_strided_slice %0 {offsets = [2, 0, 0], sizes = [1, 4, 4], strides = [1, 1, 1]} : vector<4x5x4xf32> to vector<1x4x4xf32>
    %10 = vector.shape_cast %9 : vector<1x4x4xf32> to vector<4x4xf32>
    %11 = vector.extract_strided_slice %0 {offsets = [2, 4, 0], sizes = [1, 1, 4], strides = [1, 1, 1]} : vector<4x5x4xf32> to vector<1x1x4xf32>
    %12 = vector.shape_cast %11 : vector<1x1x4xf32> to vector<1x4xf32>
    %13 = vector.extract_strided_slice %0 {offsets = [3, 0, 0], sizes = [1, 4, 4], strides = [1, 1, 1]} : vector<4x5x4xf32> to vector<1x4x4xf32>
    %14 = vector.shape_cast %13 : vector<1x4x4xf32> to vector<4x4xf32>
    %15 = vector.extract_strided_slice %0 {offsets = [3, 4, 0], sizes = [1, 1, 4], strides = [1, 1, 1]} : vector<4x5x4xf32> to vector<1x1x4xf32>
    %16 = vector.shape_cast %15 : vector<1x1x4xf32> to vector<1x4xf32>
    %c0_2 = arith.constant 0 : index
    %c0_3 = arith.constant 0 : index
    %c0_4 = arith.constant 0 : index
    %17 = vector.load %arg0[%c0_2, %c0_3, %c0_4] : memref<2x8x4xf32, #tpu.memory_space<vmem>>, vector<1x8x4xf32>
    %18 = vector.shape_cast %17 : vector<1x8x4xf32> to vector<8x4xf32>
    %cst = arith.constant dense<0.000000e+00> : vector<8x4xf32>
    %19 = tpu.matmul %18, %2, %cst {dimension_numbers = #tpu.dot_dimension_numbers<[1], [0], [0], [1], [0, 0, 1, 1], [], []>} : vector<8x4xf32>, vector<4x4xf32>, vector<8x4xf32> -> vector<8x4xf32>
    %20 = vector.broadcast %4 : vector<1x4xf32> to vector<8x4xf32>
    %21 = arith.addf %19, %20 : vector<8x4xf32>
    %c0_5 = arith.constant 0 : index
    %c0_6 = arith.constant 0 : index
    %c0_7 = arith.constant 0 : index
    %22 = vector.load %arg1[%c0_5, %c0_6, %c0_7] : memref<2x8x4xf32, #tpu.memory_space<vmem>>, vector<1x8x4xf32>
    %23 = vector.shape_cast %22 : vector<1x8x4xf32> to vector<8x4xf32>
    %cst_8 = arith.constant dense<0.000000e+00> : vector<8x4xf32>
    %24 = tpu.matmul %23, %6, %cst_8 {dimension_numbers = #tpu.dot_dimension_numbers<[1], [0], [0], [1], [0, 0, 1, 1], [], []>} : vector<8x4xf32>, vector<4x4xf32>, vector<8x4xf32> -> vector<8x4xf32>
    %25 = vector.broadcast %8 : vector<1x4xf32> to vector<8x4xf32>
    %26 = arith.addf %24, %25 : vector<8x4xf32>
    %c0_9 = arith.constant 0 : index
    %c0_10 = arith.constant 0 : index
    %c0_11 = arith.constant 0 : index
    %27 = vector.load %arg2[%c0_9, %c0_10, %c0_11] : memref<2x8x4xf32, #tpu.memory_space<vmem>>, vector<1x8x4xf32>
    %28 = vector.shape_cast %27 : vector<1x8x4xf32> to vector<8x4xf32>
    %cst_12 = arith.constant dense<0.000000e+00> : vector<8x4xf32>
    %29 = tpu.matmul %28, %10, %cst_12 {dimension_numbers = #tpu.dot_dimension_numbers<[1], [0], [0], [1], [0, 0, 1, 1], [], []>} : vector<8x4xf32>, vector<4x4xf32>, vector<8x4xf32> -> vector<8x4xf32>
    %30 = vector.broadcast %12 : vector<1x4xf32> to vector<8x4xf32>
    %31 = arith.addf %29, %30 : vector<8x4xf32>
    %32 = vector.extract_strided_slice %21 {offsets = [0, 0], sizes = [8, 2], strides = [1, 1]} : vector<8x4xf32> to vector<8x2xf32>
    %33 = vector.extract_strided_slice %26 {offsets = [0, 0], sizes = [8, 2], strides = [1, 1]} : vector<8x4xf32> to vector<8x2xf32>
    %34 = vector.extract_strided_slice %31 {offsets = [0, 0], sizes = [8, 2], strides = [1, 1]} : vector<8x4xf32> to vector<8x2xf32>
    %cst_13 = arith.constant dense<0.000000e+00> : vector<8x8xf32>
    %35 = tpu.matmul %32, %33, %cst_13 {dimension_numbers = #tpu.dot_dimension_numbers<[1], [1], [0], [0], [0, 0, 1, 0], [], []>} : vector<8x2xf32>, vector<8x2xf32>, vector<8x8xf32> -> vector<8x8xf32>
    %cst_14 = arith.constant dense<0xFF800000> : vector<8xf32>
    %36 = vector.multi_reduction <maximumf>, %35, %cst_14 [1] : vector<8x8xf32> to vector<8xf32>
    %37 = vector.shape_cast %36 : vector<8xf32> to vector<8x1xf32>
    %38 = vector.broadcast %37 : vector<8x1xf32> to vector<8x8xf32>
    %39 = arith.subf %35, %38 : vector<8x8xf32>
    %40 = math.exp %39 : vector<8x8xf32>
    %cst_15 = arith.constant dense<0.000000e+00> : vector<8xf32>
    %41 = vector.multi_reduction <add>, %40, %cst_15 [1] : vector<8x8xf32> to vector<8xf32>
    %42 = vector.shape_cast %41 : vector<8xf32> to vector<8x1xf32>
    %43 = tpu.reciprocal %42 {approx = true} : vector<8x1xf32> -> vector<8x1xf32>
    %44 = vector.broadcast %43 : vector<8x1xf32> to vector<8x8xf32>
    %45 = arith.mulf %40, %44 : vector<8x8xf32>
    %c0_16 = arith.constant 0 : index
    %c0_17 = arith.constant 0 : index
    %c0_18 = arith.constant 0 : index
    %c0_19 = arith.constant 0 : index
    %46 = vector.load %arg5[%c0_16, %c0_17, %c0_18, %c0_19] : memref<2x2x8x8xf32, #tpu.memory_space<vmem>>, vector<1x1x8x8xf32>
    %47 = vector.shape_cast %46 : vector<1x1x8x8xf32> to vector<8x8xf32>
    %48 = vector.shape_cast %45 : vector<8x8xf32> to vector<1x1x8x8xf32>
    tpu.vector_store %arg5[%c0_16, %c0_17, %c0_18, %c0_19], %48 {strides = array<i32>} : memref<2x2x8x8xf32, #tpu.memory_space<vmem>>, vector<1x1x8x8xf32>,
    %cst_20 = arith.constant dense<0.000000e+00> : vector<8x2xf32>
    %49 = tpu.matmul %45, %34, %cst_20 {dimension_numbers = #tpu.dot_dimension_numbers<[1], [0], [0], [1], [0, 0, 1, 1], [], []>} : vector<8x8xf32>, vector<8x2xf32>, vector<8x2xf32> -> vector<8x2xf32>
    %50 = vector.extract_strided_slice %21 {offsets = [0, 2], sizes = [8, 2], strides = [1, 1]} : vector<8x4xf32> to vector<8x2xf32>
    %51 = vector.extract_strided_slice %26 {offsets = [0, 2], sizes = [8, 2], strides = [1, 1]} : vector<8x4xf32> to vector<8x2xf32>
    %52 = vector.extract_strided_slice %31 {offsets = [0, 2], sizes = [8, 2], strides = [1, 1]} : vector<8x4xf32> to vector<8x2xf32>
    %cst_21 = arith.constant dense<0.000000e+00> : vector<8x8xf32>
    %53 = tpu.matmul %50, %51, %cst_21 {dimension_numbers = #tpu.dot_dimension_numbers<[1], [1], [0], [0], [0, 0, 1, 0], [], []>} : vector<8x2xf32>, vector<8x2xf32>, vector<8x8xf32> -> vector<8x8xf32>
    %cst_22 = arith.constant dense<0xFF800000> : vector<8xf32>
    %54 = vector.multi_reduction <maximumf>, %53, %cst_22 [1] : vector<8x8xf32> to vector<8xf32>
    %55 = vector.shape_cast %54 : vector<8xf32> to vector<8x1xf32>
    %56 = vector.broadcast %55 : vector<8x1xf32> to vector<8x8xf32>
    %57 = arith.subf %53, %56 : vector<8x8xf32>
    %58 = math.exp %57 : vector<8x8xf32>
    %cst_23 = arith.constant dense<0.000000e+00> : vector<8xf32>
    %59 = vector.multi_reduction <add>, %58, %cst_23 [1] : vector<8x8xf32> to vector<8xf32>
    %60 = vector.shape_cast %59 : vector<8xf32> to vector<8x1xf32>
    %61 = tpu.reciprocal %60 {approx = true} : vector<8x1xf32> -> vector<8x1xf32>
    %62 = vector.broadcast %61 : vector<8x1xf32> to vector<8x8xf32>
    %63 = arith.mulf %58, %62 : vector<8x8xf32>
    %c0_24 = arith.constant 0 : index
    %c1 = arith.constant 1 : index
    %c0_25 = arith.constant 0 : index
    %c0_26 = arith.constant 0 : index
    %64 = vector.load %arg5[%c0_24, %c1, %c0_25, %c0_26] : memref<2x2x8x8xf32, #tpu.memory_space<vmem>>, vector<1x1x8x8xf32>
    %65 = vector.shape_cast %64 : vector<1x1x8x8xf32> to vector<8x8xf32>
    %66 = vector.shape_cast %63 : vector<8x8xf32> to vector<1x1x8x8xf32>
    tpu.vector_store %arg5[%c0_24, %c1, %c0_25, %c0_26], %66 {strides = array<i32>} : memref<2x2x8x8xf32, #tpu.memory_space<vmem>>, vector<1x1x8x8xf32>,
    %cst_27 = arith.constant dense<0.000000e+00> : vector<8x2xf32>
    %67 = tpu.matmul %63, %52, %cst_27 {dimension_numbers = #tpu.dot_dimension_numbers<[1], [0], [0], [1], [0, 0, 1, 1], [], []>} : vector<8x8xf32>, vector<8x2xf32>, vector<8x2xf32> -> vector<8x2xf32>
    %68 = tpu.concatenate %49, %67 in 1 : vector<8x2xf32>, vector<8x2xf32> -> vector<8x4xf32>
    %cst_28 = arith.constant dense<0.000000e+00> : vector<8x4xf32>
    %69 = tpu.matmul %68, %14, %cst_28 {dimension_numbers = #tpu.dot_dimension_numbers<[1], [0], [0], [1], [0, 0, 1, 1], [], []>} : vector<8x4xf32>, vector<4x4xf32>, vector<8x4xf32> -> vector<8x4xf32>
    %70 = vector.broadcast %16 : vector<1x4xf32> to vector<8x4xf32>
    %71 = arith.addf %69, %70 : vector<8x4xf32>
    %c0_29 = arith.constant 0 : index
    %c0_30 = arith.constant 0 : index
    %c0_31 = arith.constant 0 : index
    %72 = vector.load %arg4[%c0_29, %c0_30, %c0_31] : memref<2x8x4xf32, #tpu.memory_space<vmem>>, vector<1x8x4xf32>
    %73 = vector.shape_cast %72 : vector<1x8x4xf32> to vector<8x4xf32>
    %74 = vector.shape_cast %71 : vector<8x4xf32> to vector<1x8x4xf32>
    tpu.vector_store %arg4[%c0_29, %c0_30, %c0_31], %74 {strides = array<i32>} : memref<2x8x4xf32, #tpu.memory_space<vmem>>, vector<1x8x4xf32>,
    %c1_32 = arith.constant 1 : index
    %c0_33 = arith.constant 0 : index
    %c0_34 = arith.constant 0 : index
    %75 = vector.load %arg0[%c1_32, %c0_33, %c0_34] : memref<2x8x4xf32, #tpu.memory_space<vmem>>, vector<1x8x4xf32>
    %76 = vector.shape_cast %75 : vector<1x8x4xf32> to vector<8x4xf32>
    %cst_35 = arith.constant dense<0.000000e+00> : vector<8x4xf32>
    %77 = tpu.matmul %76, %2, %cst_35 {dimension_numbers = #tpu.dot_dimension_numbers<[1], [0], [0], [1], [0, 0, 1, 1], [], []>} : vector<8x4xf32>, vector<4x4xf32>, vector<8x4xf32> -> vector<8x4xf32>
    %78 = vector.broadcast %4 : vector<1x4xf32> to vector<8x4xf32>
    %79 = arith.addf %77, %78 : vector<8x4xf32>
    %c1_36 = arith.constant 1 : index
    %c0_37 = arith.constant 0 : index
    %c0_38 = arith.constant 0 : index
    %80 = vector.load %arg1[%c1_36, %c0_37, %c0_38] : memref<2x8x4xf32, #tpu.memory_space<vmem>>, vector<1x8x4xf32>
    %81 = vector.shape_cast %80 : vector<1x8x4xf32> to vector<8x4xf32>
    %cst_39 = arith.constant dense<0.000000e+00> : vector<8x4xf32>
    %82 = tpu.matmul %81, %6, %cst_39 {dimension_numbers = #tpu.dot_dimension_numbers<[1], [0], [0], [1], [0, 0, 1, 1], [], []>} : vector<8x4xf32>, vector<4x4xf32>, vector<8x4xf32> -> vector<8x4xf32>
    %83 = vector.broadcast %8 : vector<1x4xf32> to vector<8x4xf32>
    %84 = arith.addf %82, %83 : vector<8x4xf32>
    %c1_40 = arith.constant 1 : index
    %c0_41 = arith.constant 0 : index
    %c0_42 = arith.constant 0 : index
    %85 = vector.load %arg2[%c1_40, %c0_41, %c0_42] : memref<2x8x4xf32, #tpu.memory_space<vmem>>, vector<1x8x4xf32>
    %86 = vector.shape_cast %85 : vector<1x8x4xf32> to vector<8x4xf32>
    %cst_43 = arith.constant dense<0.000000e+00> : vector<8x4xf32>
    %87 = tpu.matmul %86, %10, %cst_43 {dimension_numbers = #tpu.dot_dimension_numbers<[1], [0], [0], [1], [0, 0, 1, 1], [], []>} : vector<8x4xf32>, vector<4x4xf32>, vector<8x4xf32> -> vector<8x4xf32>
    %88 = vector.broadcast %12 : vector<1x4xf32> to vector<8x4xf32>
    %89 = arith.addf %87, %88 : vector<8x4xf32>
    %90 = vector.extract_strided_slice %79 {offsets = [0, 0], sizes = [8, 2], strides = [1, 1]} : vector<8x4xf32> to vector<8x2xf32>
    %91 = vector.extract_strided_slice %84 {offsets = [0, 0], sizes = [8, 2], strides = [1, 1]} : vector<8x4xf32> to vector<8x2xf32>
    %92 = vector.extract_strided_slice %89 {offsets = [0, 0], sizes = [8, 2], strides = [1, 1]} : vector<8x4xf32> to vector<8x2xf32>
    %cst_44 = arith.constant dense<0.000000e+00> : vector<8x8xf32>
    %93 = tpu.matmul %90, %91, %cst_44 {dimension_numbers = #tpu.dot_dimension_numbers<[1], [1], [0], [0], [0, 0, 1, 0], [], []>} : vector<8x2xf32>, vector<8x2xf32>, vector<8x8xf32> -> vector<8x8xf32>
    %cst_45 = arith.constant dense<0xFF800000> : vector<8xf32>
    %94 = vector.multi_reduction <maximumf>, %93, %cst_45 [1] : vector<8x8xf32> to vector<8xf32>
    %95 = vector.shape_cast %94 : vector<8xf32> to vector<8x1xf32>
    %96 = vector.broadcast %95 : vector<8x1xf32> to vector<8x8xf32>
    %97 = arith.subf %93, %96 : vector<8x8xf32>
    %98 = math.exp %97 : vector<8x8xf32>
    %cst_46 = arith.constant dense<0.000000e+00> : vector<8xf32>
    %99 = vector.multi_reduction <add>, %98, %cst_46 [1] : vector<8x8xf32> to vector<8xf32>
    %100 = vector.shape_cast %99 : vector<8xf32> to vector<8x1xf32>
    %101 = tpu.reciprocal %100 {approx = true} : vector<8x1xf32> -> vector<8x1xf32>
    %102 = vector.broadcast %101 : vector<8x1xf32> to vector<8x8xf32>
    %103 = arith.mulf %98, %102 : vector<8x8xf32>
    %c1_47 = arith.constant 1 : index
    %c0_48 = arith.constant 0 : index
    %c0_49 = arith.constant 0 : index
    %c0_50 = arith.constant 0 : index
    %104 = vector.load %arg5[%c1_47, %c0_48, %c0_49, %c0_50] : memref<2x2x8x8xf32, #tpu.memory_space<vmem>>, vector<1x1x8x8xf32>
    %105 = vector.shape_cast %104 : vector<1x1x8x8xf32> to vector<8x8xf32>
    %106 = vector.shape_cast %103 : vector<8x8xf32> to vector<1x1x8x8xf32>
    tpu.vector_store %arg5[%c1_47, %c0_48, %c0_49, %c0_50], %106 {strides = array<i32>} : memref<2x2x8x8xf32, #tpu.memory_space<vmem>>, vector<1x1x8x8xf32>,
    %cst_51 = arith.constant dense<0.000000e+00> : vector<8x2xf32>
    %107 = tpu.matmul %103, %92, %cst_51 {dimension_numbers = #tpu.dot_dimension_numbers<[1], [0], [0], [1], [0, 0, 1, 1], [], []>} : vector<8x8xf32>, vector<8x2xf32>, vector<8x2xf32> -> vector<8x2xf32>
    %108 = vector.extract_strided_slice %79 {offsets = [0, 2], sizes = [8, 2], strides = [1, 1]} : vector<8x4xf32> to vector<8x2xf32>
    %109 = vector.extract_strided_slice %84 {offsets = [0, 2], sizes = [8, 2], strides = [1, 1]} : vector<8x4xf32> to vector<8x2xf32>
    %110 = vector.extract_strided_slice %89 {offsets = [0, 2], sizes = [8, 2], strides = [1, 1]} : vector<8x4xf32> to vector<8x2xf32>
    %cst_52 = arith.constant dense<0.000000e+00> : vector<8x8xf32>
    %111 = tpu.matmul %108, %109, %cst_52 {dimension_numbers = #tpu.dot_dimension_numbers<[1], [1], [0], [0], [0, 0, 1, 0], [], []>} : vector<8x2xf32>, vector<8x2xf32>, vector<8x8xf32> -> vector<8x8xf32>
    %cst_53 = arith.constant dense<0xFF800000> : vector<8xf32>
    %112 = vector.multi_reduction <maximumf>, %111, %cst_53 [1] : vector<8x8xf32> to vector<8xf32>
    %113 = vector.shape_cast %112 : vector<8xf32> to vector<8x1xf32>
    %114 = vector.broadcast %113 : vector<8x1xf32> to vector<8x8xf32>
    %115 = arith.subf %111, %114 : vector<8x8xf32>
    %116 = math.exp %115 : vector<8x8xf32>
    %cst_54 = arith.constant dense<0.000000e+00> : vector<8xf32>
    %117 = vector.multi_reduction <add>, %116, %cst_54 [1] : vector<8x8xf32> to vector<8xf32>
    %118 = vector.shape_cast %117 : vector<8xf32> to vector<8x1xf32>
    %119 = tpu.reciprocal %118 {approx = true} : vector<8x1xf32> -> vector<8x1xf32>
    %120 = vector.broadcast %119 : vector<8x1xf32> to vector<8x8xf32>
    %121 = arith.mulf %116, %120 : vector<8x8xf32>
    %c1_55 = arith.constant 1 : index
    %c1_56 = arith.constant 1 : index
    %c0_57 = arith.constant 0 : index
    %c0_58 = arith.constant 0 : index
    %122 = vector.load %arg5[%c1_55, %c1_56, %c0_57, %c0_58] : memref<2x2x8x8xf32, #tpu.memory_space<vmem>>, vector<1x1x8x8xf32>
    %123 = vector.shape_cast %122 : vector<1x1x8x8xf32> to vector<8x8xf32>
    %124 = vector.shape_cast %121 : vector<8x8xf32> to vector<1x1x8x8xf32>
    tpu.vector_store %arg5[%c1_55, %c1_56, %c0_57, %c0_58], %124 {strides = array<i32>} : memref<2x2x8x8xf32, #tpu.memory_space<vmem>>, vector<1x1x8x8xf32>,
    %cst_59 = arith.constant dense<0.000000e+00> : vector<8x2xf32>
    %125 = tpu.matmul %121, %110, %cst_59 {dimension_numbers = #tpu.dot_dimension_numbers<[1], [0], [0], [1], [0, 0, 1, 1], [], []>} : vector<8x8xf32>, vector<8x2xf32>, vector<8x2xf32> -> vector<8x2xf32>
    %126 = tpu.concatenate %107, %125 in 1 : vector<8x2xf32>, vector<8x2xf32> -> vector<8x4xf32>
    %cst_60 = arith.constant dense<0.000000e+00> : vector<8x4xf32>
    %127 = tpu.matmul %126, %14, %cst_60 {dimension_numbers = #tpu.dot_dimension_numbers<[1], [0], [0], [1], [0, 0, 1, 1], [], []>} : vector<8x4xf32>, vector<4x4xf32>, vector<8x4xf32> -> vector<8x4xf32>
    %128 = vector.broadcast %16 : vector<1x4xf32> to vector<8x4xf32>
    %129 = arith.addf %127, %128 : vector<8x4xf32>
    %c1_61 = arith.constant 1 : index
    %c0_62 = arith.constant 0 : index
    %c0_63 = arith.constant 0 : index
    %130 = vector.load %arg4[%c1_61, %c0_62, %c0_63] : memref<2x8x4xf32, #tpu.memory_space<vmem>>, vector<1x8x4xf32>
    %131 = vector.shape_cast %130 : vector<1x8x4xf32> to vector<8x4xf32>
    %132 = vector.shape_cast %129 : vector<8x4xf32> to vector<1x8x4xf32>
    tpu.vector_store %arg4[%c1_61, %c0_62, %c0_63], %132 {strides = array<i32>} : memref<2x8x4xf32, #tpu.memory_space<vmem>>, vector<1x8x4xf32>,
    return
  }
}

</mosaic_0001>

<llo_original>
// kernel: tpu_custom_call.1
$region0: #{tpu_custom_call.1}
  #allocation0 [shape = 'u32[]', space=smem, size = 0x4, offset = 0x4, fixed_abs, tag = 'smem constant byte address 0x4 - core index']
  #allocation1 [shape = 'u32[144,128]{1,0:T(1,128)}', space=vmem, size = 0x12000, scoped, tag = 'internal scratch']
  %s0 = inlined_call_operand.vmem [shape: f32[2,8,4], index: 0, kind: input, shape index: {}]
  %s1 = inlined_call_operand.vmem [shape: f32[2,8,4], index: 1, kind: input, shape index: {}]
  %s2 = inlined_call_operand.vmem [shape: f32[2,8,4], index: 2, kind: input, shape index: {}]
  %s3 = inlined_call_operand.vmem [shape: f32[4,5,4], index: 3, kind: input, shape index: {}]
  %s4 = inlined_call_operand.vmem [shape: f32[2,8,4], index: 4, kind: output, shape index: {0}]
  %s5 = inlined_call_operand.hbm [shape: f32[2,2,8,8], index: 5, kind: output, shape index: {1}]
  %6 = xla_tuple %s4, %s5
  %s7 = sld [smem:[#allocation0]]
  $region34: #{tpu_custom_call.1} parent=0
    _
  %s9 = ssub.s32 1, %s7
  %s10 = scalar_select 0, %s9, %s7
  $region1: #{tpu_custom_call.1} parent=0
    #allocation2 [shape = 'u8[16384]{0}', space=vmem, size = 0x4000, scoped, tag = 'output window, operand 1, single buffered']
    #allocation3 [shape = 's32[1]{0}', space=sflag, size = 0x4, scoped, tag = 'scoped memory for tpu_custom_call.1']
    %11 = vsyncpa [#allocation3], 0
    // Predicated region
    $region2: #{tpu_custom_call.1} parent=1 // pred_check
      _
    $region3: #{tpu_custom_call.1} parent=1 // pred_check_branch
      %13 = sbr.rel (0) target = $region5
    $region4: #{tpu_custom_call.1} parent=1 // pred_region
      _
    $region5: #{tpu_custom_call.1} parent=1 // pred_fallthru
      _
    // Predicated region
    $region6: #{tpu_custom_call.1} parent=1 // pred_check
      _
    $region7: #{tpu_custom_call.1} parent=1 // pred_check_branch
      %15 = sbr.rel (0) target = $region9
    $region8: #{tpu_custom_call.1} parent=1 // pred_region
      _
    $region9: #{tpu_custom_call.1} parent=1 // pred_fallthru
      _
    // Predicated region
    $region10: #{tpu_custom_call.1} parent=1 // pred_check
      _
    $region11: #{tpu_custom_call.1} parent=1 // pred_check_branch
      %17 = sbr.rel (0) target = $region13
    $region12: #{tpu_custom_call.1} parent=1 // pred_region
      _
    $region13: #{tpu_custom_call.1} parent=1 // pred_fallthru
      _
    // Predicated region
    $region14: #{tpu_custom_call.1} parent=1 // pred_check
      _
    $region15: #{tpu_custom_call.1} parent=1 // pred_check_branch
      %19 = sbr.rel (0) target = $region17
    $region16: #{tpu_custom_call.1} parent=1 // pred_region
      _
    $region17: #{tpu_custom_call.1} parent=1 // pred_fallthru
      _
    %v20 = vld [vmem:[%s3] sm:$0x1f]
    %v21 = vld [vmem:[%s3 + $0x8] sm:$0x1f]
    %v22 = vld [vmem:[%s3 + $0x10] sm:$0x1f]
    %v23 = vld [vmem:[%s3 + $0x18] sm:$0x1f]
    %v24 = vld [vmem:[%s0] sm:$0xff]
    %v25 = vlaneseq
    %v26 = vshrl.u32 %v25, 7
    %v27 = vsub.s32 4, %v26
    %v28 = vrot.slane %v20, %v27
    %vm29 = vcmask 31744
    %v31 = vsel %vm29, %v24, 0
    %vm33 = vcmask 1043456
    %v35 = vsel %vm33, %v20, 0
    %37 = vmatprep.subr.mxu0 0.0
    %38 = vmatpush1.msra.mxu0 %v35
    %39 = vmatprep.subr.mxu0 0.0
    %40 = vmatpush1.msra.mxu0 0.0
    %41 = vmatprep.subr.mxu0 0.0
    %42 = vmatpush1.msra.mxu0 0.0
    %43 = vmatprep.subr.mxu0 0.0
    %44 = vmatpush1.msra.mxu0 0.0
    %45 = vmatprep.subr.mxu0 0.0
    %46 = vmatpush1.msra.mxu0 0.0
    %47 = vmatprep.subr.mxu0 0.0
    %48 = vmatpush1.msra.mxu0 0.0
    %49 = vmatprep.subr.mxu0 0.0
    %50 = vmatpush1.msra.mxu0 0.0
    %51 = vmatprep.subr.mxu0 0.0
    %52 = vmatpush1.msra.mxu0 0.0
    %53 = vmatprep.subr.mxu0 0.0
    %54 = vmatpush1.msra.mxu0 0.0
    %55 = vmatprep.subr.mxu0 0.0
    %56 = vmatpush1.msra.mxu0 0.0
    %57 = vmatprep.subr.mxu0 0.0
    %58 = vmatpush1.msra.mxu0 0.0
    %59 = vmatprep.subr.mxu0 0.0
    %60 = vmatpush1.msra.mxu0 0.0
    %61 = vmatprep.subr.mxu0 0.0
    %62 = vmatpush1.msra.mxu0 0.0
    %63 = vmatprep.subr.mxu0 0.0
    %64 = vmatpush1.msra.mxu0 0.0
    %65 = vmatprep.subr.mxu0 0.0
    %66 = vmatpush1.msra.mxu0 0.0
    %67 = vmatprep.subr.mxu0 0.0
    %68 = vmatpush1.msra.mxu0 0.0
    %69 = vmatprep.subr.mxu0 0.0
    %70 = vmatpush1.msra.mxu0 0.0
    %71 = vmatprep.subr.mxu0 0.0
    %72 = vmatpush1.msra.mxu0 0.0
    %73 = vmatprep.subr.mxu0 0.0
    %74 = vmatpush1.msra.mxu0 0.0
    %75 = vmatprep.subr.mxu0 0.0
    %76 = vmatpush1.msra.mxu0 0.0
    %77 = vmatprep.subr.mxu0 0.0
    %78 = vmatpush1.msra.mxu0 0.0
    %79 = vmatprep.subr.mxu0 0.0
    %80 = vmatpush1.msra.mxu0 0.0
    %81 = vmatprep.subr.mxu0 0.0
    %82 = vmatpush1.msra.mxu0 0.0
    %83 = vmatprep.subr.mxu0 0.0
    %84 = vmatpush1.msra.mxu0 0.0
    %85 = vmatprep.subr.mxu0 0.0
    %86 = vmatpush1.msra.mxu0 0.0
    %87 = vmatprep.subr.mxu0 0.0
    %88 = vmatpush1.msra.mxu0 0.0
    %89 = vmatprep.subr.mxu0 0.0
    %90 = vmatpush1.msra.mxu0 0.0
    %91 = vmatprep.subr.mxu0 0.0
    %92 = vmatpush1.msra.mxu0 0.0
    %93 = vmatprep.subr.mxu0 0.0
    %94 = vmatpush1.msra.mxu0 0.0
    %95 = vmatprep.subr.mxu0 0.0
    %96 = vmatpush1.msra.mxu0 0.0
    %97 = vmatprep.subr.mxu0 0.0
    %98 = vmatpush1.msra.mxu0 0.0
    %99 = vmatprep.subr.mxu0 0.0
    %100 = vmatpush1.msra.mxu0 0.0
    %101 = vmatprep.mubr.f32.mxu0 0.0
    %102 = vmatmul.mubr.f32.gmra.mrb[0].mxu0 %v31
    %v103 = vpop.f32.mrb[0].mxu0
    %v104 = vadd.f32 %v28, %v103
    %v105 = vpop.f32.mrb[0].mxu0
    %106 = vdwg.mxu0
    %v107 = vld [vmem:[%s1] sm:$0xff]
    %v108 = vlaneseq
    %v109 = vshrl.u32 %v108, 7
    %v110 = vsub.s32 4, %v109
    %v111 = vrot.slane %v21, %v110
    %v113 = vsel %vm29, %v107, 0
    %v116 = vsel %vm33, %v21, 0
    %118 = vmatprep.subr.mxu0 0.0
    %119 = vmatpush1.msra.mxu0 %v116
    %120 = vmatprep.subr.mxu0 0.0
    %121 = vmatpush1.msra.mxu0 0.0
    %122 = vmatprep.subr.mxu0 0.0
    %123 = vmatpush1.msra.mxu0 0.0
    %124 = vmatprep.subr.mxu0 0.0
    %125 = vmatpush1.msra.mxu0 0.0
    %126 = vmatprep.subr.mxu0 0.0
    %127 = vmatpush1.msra.mxu0 0.0
    %128 = vmatprep.subr.mxu0 0.0
    %129 = vmatpush1.msra.mxu0 0.0
    %130 = vmatprep.subr.mxu0 0.0
    %131 = vmatpush1.msra.mxu0 0.0
    %132 = vmatprep.subr.mxu0 0.0
    %133 = vmatpush1.msra.mxu0 0.0
    %134 = vmatprep.subr.mxu0 0.0
    %135 = vmatpush1.msra.mxu0 0.0
    %136 = vmatprep.subr.mxu0 0.0
    %137 = vmatpush1.msra.mxu0 0.0
    %138 = vmatprep.subr.mxu0 0.0
    %139 = vmatpush1.msra.mxu0 0.0
    %140 = vmatprep.subr.mxu0 0.0
    %141 = vmatpush1.msra.mxu0 0.0
    %142 = vmatprep.subr.mxu0 0.0
    %143 = vmatpush1.msra.mxu0 0.0
    %144 = vmatprep.subr.mxu0 0.0
    %145 = vmatpush1.msra.mxu0 0.0
    %146 = vmatprep.subr.mxu0 0.0
    %147 = vmatpush1.msra.mxu0 0.0
    %148 = vmatprep.subr.mxu0 0.0
    %149 = vmatpush1.msra.mxu0 0.0
    %150 = vmatprep.subr.mxu0 0.0
    %151 = vmatpush1.msra.mxu0 0.0
    %152 = vmatprep.subr.mxu0 0.0
    %153 = vmatpush1.msra.mxu0 0.0
    %154 = vmatprep.subr.mxu0 0.0
    %155 = vmatpush1.msra.mxu0 0.0
    %156 = vmatprep.subr.mxu0 0.0
    %157 = vmatpush1.msra.mxu0 0.0
    %158 = vmatprep.subr.mxu0 0.0
    %159 = vmatpush1.msra.mxu0 0.0
    %160 = vmatprep.subr.mxu0 0.0
    %161 = vmatpush1.msra.mxu0 0.0
    %162 = vmatprep.subr.mxu0 0.0
    %163 = vmatpush1.msra.mxu0 0.0
    %164 = vmatprep.subr.mxu0 0.0
    %165 = vmatpush1.msra.mxu0 0.0
    %166 = vmatprep.subr.mxu0 0.0
    %167 = vmatpush1.msra.mxu0 0.0
    %168 = vmatprep.subr.mxu0 0.0
    %169 = vmatpush1.msra.mxu0 0.0
    %170 = vmatprep.subr.mxu0 0.0
    %171 = vmatpush1.msra.mxu0 0.0
    %172 = vmatprep.subr.mxu0 0.0
    %173 = vmatpush1.msra.mxu0 0.0
    %174 = vmatprep.subr.mxu0 0.0
    %175 = vmatpush1.msra.mxu0 0.0
    %176 = vmatprep.subr.mxu0 0.0
    %177 = vmatpush1.msra.mxu0 0.0
    %178 = vmatprep.subr.mxu0 0.0
    %179 = vmatpush1.msra.mxu0 0.0
    %180 = vmatprep.subr.mxu0 0.0
    %181 = vmatpush1.msra.mxu0 0.0
    %182 = vmatprep.mubr.f32.mxu0 0.0
    %183 = vmatmul.mubr.f32.gmra.mrb[0].mxu0 %v113
    %v184 = vpop.f32.mrb[0].mxu0
    %v185 = vadd.f32 %v111, %v184
    %v186 = vpop.f32.mrb[0].mxu0
    %187 = vdwg.mxu0
    %v188 = vld [vmem:[%s2] sm:$0xff]
    %v189 = vlaneseq
    %v190 = vshrl.u32 %v189, 7
    %v191 = vsub.s32 4, %v190
    %v192 = vrot.slane %v22, %v191
    %v194 = vsel %vm29, %v188, 0
    %v197 = vsel %vm33, %v22, 0
    %199 = vmatprep.subr.mxu0 0.0
    %200 = vmatpush1.msra.mxu0 %v197
    %201 = vmatprep.subr.mxu0 0.0
    %202 = vmatpush1.msra.mxu0 0.0
    %203 = vmatprep.subr.mxu0 0.0
    %204 = vmatpush1.msra.mxu0 0.0
    %205 = vmatprep.subr.mxu0 0.0
    %206 = vmatpush1.msra.mxu0 0.0
    %207 = vmatprep.subr.mxu0 0.0
    %208 = vmatpush1.msra.mxu0 0.0
    %209 = vmatprep.subr.mxu0 0.0
    %210 = vmatpush1.msra.mxu0 0.0
    %211 = vmatprep.subr.mxu0 0.0
    %212 = vmatpush1.msra.mxu0 0.0
    %213 = vmatprep.subr.mxu0 0.0
    %214 = vmatpush1.msra.mxu0 0.0
    %215 = vmatprep.subr.mxu0 0.0
    %216 = vmatpush1.msra.mxu0 0.0
    %217 = vmatprep.subr.mxu0 0.0
    %218 = vmatpush1.msra.mxu0 0.0
    %219 = vmatprep.subr.mxu0 0.0
    %220 = vmatpush1.msra.mxu0 0.0
    %221 = vmatprep.subr.mxu0 0.0
    %222 = vmatpush1.msra.mxu0 0.0
    %223 = vmatprep.subr.mxu0 0.0
    %224 = vmatpush1.msra.mxu0 0.0
    %225 = vmatprep.subr.mxu0 0.0
    %226 = vmatpush1.msra.mxu0 0.0
    %227 = vmatprep.subr.mxu0 0.0
    %228 = vmatpush1.msra.mxu0 0.0
    %229 = vmatprep.subr.mxu0 0.0
    %230 = vmatpush1.msra.mxu0 0.0
    %231 = vmatprep.subr.mxu0 0.0
    %232 = vmatpush1.msra.mxu0 0.0
    %233 = vmatprep.subr.mxu0 0.0
    %234 = vmatpush1.msra.mxu0 0.0
    %235 = vmatprep.subr.mxu0 0.0
    %236 = vmatpush1.msra.mxu0 0.0
    %237 = vmatprep.subr.mxu0 0.0
    %238 = vmatpush1.msra.mxu0 0.0
    %239 = vmatprep.subr.mxu0 0.0
    %240 = vmatpush1.msra.mxu0 0.0
    %241 = vmatprep.subr.mxu0 0.0
    %242 = vmatpush1.msra.mxu0 0.0
    %243 = vmatprep.subr.mxu0 0.0
    %244 = vmatpush1.msra.mxu0 0.0
    %245 = vmatprep.subr.mxu0 0.0
    %246 = vmatpush1.msra.mxu0 0.0
    %247 = vmatprep.subr.mxu0 0.0
    %248 = vmatpush1.msra.mxu0 0.0
    %249 = vmatprep.subr.mxu0 0.0
    %250 = vmatpush1.msra.mxu0 0.0
    %251 = vmatprep.subr.mxu0 0.0
    %252 = vmatpush1.msra.mxu0 0.0
    %253 = vmatprep.subr.mxu0 0.0
    %254 = vmatpush1.msra.mxu0 0.0
    %255 = vmatprep.subr.mxu0 0.0
    %256 = vmatpush1.msra.mxu0 0.0
    %257 = vmatprep.subr.mxu0 0.0
    %258 = vmatpush1.msra.mxu0 0.0
    %259 = vmatprep.subr.mxu0 0.0
    %260 = vmatpush1.msra.mxu0 0.0
    %261 = vmatprep.subr.mxu0 0.0
    %262 = vmatpush1.msra.mxu0 0.0
    %263 = vmatprep.mubr.f32.mxu0 0.0
    %264 = vmatmul.mubr.f32.gmra.mrb[0].mxu0 %v194
    %v265 = vpop.f32.mrb[0].mxu0
    %v266 = vadd.f32 %v192, %v265
    %v267 = vpop.f32.mrb[0].mxu0
    %268 = vdwg.mxu0
    %vm269 = vcmask 15360
    %v271 = vsel %vm269, %v104, 0
    %v274 = vsel %vm269, %v185, 0
    %276 = vmatprep.subr.mxu0 0.0
    %277 = vmatpush1.xpose.msra.mxu0 %v274
    %278 = vmatprep.subr.mxu0 0.0
    %279 = vmatpush1.xpose.msra.mxu0 0.0
    %280 = vmatprep.subr.mxu0 0.0
    %281 = vmatpush1.xpose.msra.mxu0 0.0
    %282 = vmatprep.subr.mxu0 0.0
    %283 = vmatpush1.xpose.msra.mxu0 0.0
    %284 = vmatprep.subr.mxu0 0.0
    %285 = vmatpush1.xpose.msra.mxu0 0.0
    %286 = vmatprep.subr.mxu0 0.0
    %287 = vmatpush1.xpose.msra.mxu0 0.0
    %288 = vmatprep.subr.mxu0 0.0
    %289 = vmatpush1.xpose.msra.mxu0 0.0
    %290 = vmatprep.subr.mxu0 0.0
    %291 = vmatpush1.xpose.msra.mxu0 0.0
    %292 = vmatprep.subr.mxu0 0.0
    %293 = vmatpush1.xpose.msra.mxu0 0.0
    %294 = vmatprep.subr.mxu0 0.0
    %295 = vmatpush1.xpose.msra.mxu0 0.0
    %296 = vmatprep.subr.mxu0 0.0
    %297 = vmatpush1.xpose.msra.mxu0 0.0
    %298 = vmatprep.subr.mxu0 0.0
    %299 = vmatpush1.xpose.msra.mxu0 0.0
    %300 = vmatprep.subr.mxu0 0.0
    %301 = vmatpush1.xpose.msra.mxu0 0.0
    %302 = vmatprep.subr.mxu0 0.0
    %303 = vmatpush1.xpose.msra.mxu0 0.0
    %304 = vmatprep.subr.mxu0 0.0
    %305 = vmatpush1.xpose.msra.mxu0 0.0
    %306 = vmatprep.subr.mxu0 0.0
    %307 = vmatpush1.xpose.msra.mxu0 0.0
    %308 = vmatprep.subr.mxu0 0.0
    %309 = vmatpush1.xpose.msra.mxu0 0.0
    %310 = vmatprep.subr.mxu0 0.0
    %311 = vmatpush1.xpose.msra.mxu0 0.0
    %312 = vmatprep.subr.mxu0 0.0
    %313 = vmatpush1.xpose.msra.mxu0 0.0
    %314 = vmatprep.subr.mxu0 0.0
    %315 = vmatpush1.xpose.msra.mxu0 0.0
    %316 = vmatprep.subr.mxu0 0.0
    %317 = vmatpush1.xpose.msra.mxu0 0.0
    %318 = vmatprep.subr.mxu0 0.0
    %319 = vmatpush1.xpose.msra.mxu0 0.0
    %320 = vmatprep.subr.mxu0 0.0
    %321 = vmatpush1.xpose.msra.mxu0 0.0
    %322 = vmatprep.subr.mxu0 0.0
    %323 = vmatpush1.xpose.msra.mxu0 0.0
    %324 = vmatprep.subr.mxu0 0.0
    %325 = vmatpush1.xpose.msra.mxu0 0.0
    %326 = vmatprep.subr.mxu0 0.0
    %327 = vmatpush1.xpose.msra.mxu0 0.0
    %328 = vmatprep.subr.mxu0 0.0
    %329 = vmatpush1.xpose.msra.mxu0 0.0
    %330 = vmatprep.subr.mxu0 0.0
    %331 = vmatpush1.xpose.msra.mxu0 0.0
    %332 = vmatprep.subr.mxu0 0.0
    %333 = vmatpush1.xpose.msra.mxu0 0.0
    %334 = vmatprep.subr.mxu0 0.0
    %335 = vmatpush1.xpose.msra.mxu0 0.0
    %336 = vmatprep.subr.mxu0 0.0
    %337 = vmatpush1.xpose.msra.mxu0 0.0
    %338 = vmatprep.subr.mxu0 0.0
    %339 = vmatpush1.xpose.msra.mxu0 0.0
    %340 = vmatprep.mubr.f32.mxu0 0.0
    %341 = vmatmul.mubr.f32.gmra.mrb[0].mxu0 %v271
    %v342 = vpop.f32.mrb[0].mxu0
    %v343 = vadd.f32 0.0, %v342
    %v344 = vpop.f32.mrb[0].mxu0
    %345 = vdwg.mxu0
    %vm346 = vcmask 64512
    %v347 = vsel %vm346, %v343, -inf
    %348 = vmax.xlane.f32.xlu0 %v347
    %v349 = vpop.xlane.xlu0 %348
    %v350 = vsub.f32 %v343, %v349
    %v351 = vmul.f32 %v350, 1.442695
    %v352 = vpow.pop %v351
    %v353 = vsel %vm346, %v352, 0.0
    %354 = vadd.xlane.f32.xlu0 %v353
    %v355 = vpop.xlane.xlu0 %354
    %v356 = vrcp.pop %v355
    %v357 = vmul.f32 %v352, %v356
    %358 = vst.msk [vmem:[#allocation2] sm:$0xff] %vm346, %v357
    %v360 = vsel %vm346, %v357, 0
    %362 = vmatprep.subr.mxu0 0.0
    %363 = vmatpush1.msra.mxu0 %v266
    %364 = vmatprep.subr.mxu0 0.0
    %365 = vmatpush1.msra.mxu0 0.0
    %366 = vmatprep.subr.mxu0 0.0
    %367 = vmatpush1.msra.mxu0 0.0
    %368 = vmatprep.subr.mxu0 0.0
    %369 = vmatpush1.msra.mxu0 0.0
    %370 = vmatprep.subr.mxu0 0.0
    %371 = vmatpush1.msra.mxu0 0.0
    %372 = vmatprep.subr.mxu0 0.0
    %373 = vmatpush1.msra.mxu0 0.0
    %374 = vmatprep.subr.mxu0 0.0
    %375 = vmatpush1.msra.mxu0 0.0
    %376 = vmatprep.subr.mxu0 0.0
    %377 = vmatpush1.msra.mxu0 0.0
    %378 = vmatprep.subr.mxu0 0.0
    %379 = vmatpush1.msra.mxu0 0.0
    %380 = vmatprep.subr.mxu0 0.0
    %381 = vmatpush1.msra.mxu0 0.0
    %382 = vmatprep.subr.mxu0 0.0
    %383 = vmatpush1.msra.mxu0 0.0
    %384 = vmatprep.subr.mxu0 0.0
    %385 = vmatpush1.msra.mxu0 0.0
    %386 = vmatprep.subr.mxu0 0.0
    %387 = vmatpush1.msra.mxu0 0.0
    %388 = vmatprep.subr.mxu0 0.0
    %389 = vmatpush1.msra.mxu0 0.0
    %390 = vmatprep.subr.mxu0 0.0
    %391 = vmatpush1.msra.mxu0 0.0
    %392 = vmatprep.subr.mxu0 0.0
    %393 = vmatpush1.msra.mxu0 0.0
    %394 = vmatprep.subr.mxu0 0.0
    %395 = vmatpush1.msra.mxu0 0.0
    %396 = vmatprep.subr.mxu0 0.0
    %397 = vmatpush1.msra.mxu0 0.0
    %398 = vmatprep.subr.mxu0 0.0
    %399 = vmatpush1.msra.mxu0 0.0
    %400 = vmatprep.subr.mxu0 0.0
    %401 = vmatpush1.msra.mxu0 0.0
    %402 = vmatprep.subr.mxu0 0.0
    %403 = vmatpush1.msra.mxu0 0.0
    %404 = vmatprep.subr.mxu0 0.0
    %405 = vmatpush1.msra.mxu0 0.0
    %406 = vmatprep.subr.mxu0 0.0
    %407 = vmatpush1.msra.mxu0 0.0
    %408 = vmatprep.subr.mxu0 0.0
    %409 = vmatpush1.msra.mxu0 0.0
    %410 = vmatprep.subr.mxu0 0.0
    %411 = vmatpush1.msra.mxu0 0.0
    %412 = vmatprep.subr.mxu0 0.0
    %413 = vmatpush1.msra.mxu0 0.0
    %414 = vmatprep.subr.mxu0 0.0
    %415 = vmatpush1.msra.mxu0 0.0
    %416 = vmatprep.subr.mxu0 0.0
    %417 = vmatpush1.msra.mxu0 0.0
    %418 = vmatprep.subr.mxu0 0.0
    %419 = vmatpush1.msra.mxu0 0.0
    %420 = vmatprep.subr.mxu0 0.0
    %421 = vmatpush1.msra.mxu0 0.0
    %422 = vmatprep.subr.mxu0 0.0
    %423 = vmatpush1.msra.mxu0 0.0
    %424 = vmatprep.subr.mxu0 0.0
    %425 = vmatpush1.msra.mxu0 0.0
    %426 = vmatprep.mubr.f32.mxu0 0.0
    %427 = vmatmul.mubr.f32.gmra.mrb[0].mxu0 %v360
    %v428 = vpop.f32.mrb[0].mxu0
    %v429 = vadd.f32 0.0, %v428
    %v430 = vpop.f32.mrb[0].mxu0
    %431 = vdwg.mxu0
    %432 = vrot.lane.b32.xlu0 %v104, 126
    %v433 = vpop.permute.xlu0 %432
    %434 = vrot.lane.b32.xlu0 %v185, 126
    %v435 = vpop.permute.xlu0 %434
    %v436 = vsel %vm269, %v433, 0
    %v438 = vsel %vm269, %v435, 0
    %440 = vmatprep.subr.mxu0 0.0
    %441 = vmatpush1.xpose.msra.mxu0 %v438
    %442 = vmatprep.subr.mxu0 0.0
    %443 = vmatpush1.xpose.msra.mxu0 0.0
    %444 = vmatprep.subr.mxu0 0.0
    %445 = vmatpush1.xpose.msra.mxu0 0.0
    %446 = vmatprep.subr.mxu0 0.0
    %447 = vmatpush1.xpose.msra.mxu0 0.0
    %448 = vmatprep.subr.mxu0 0.0
    %449 = vmatpush1.xpose.msra.mxu0 0.0
    %450 = vmatprep.subr.mxu0 0.0
    %451 = vmatpush1.xpose.msra.mxu0 0.0
    %452 = vmatprep.subr.mxu0 0.0
    %453 = vmatpush1.xpose.msra.mxu0 0.0
    %454 = vmatprep.subr.mxu0 0.0
    %455 = vmatpush1.xpose.msra.mxu0 0.0
    %456 = vmatprep.subr.mxu0 0.0
    %457 = vmatpush1.xpose.msra.mxu0 0.0
    %458 = vmatprep.subr.mxu0 0.0
    %459 = vmatpush1.xpose.msra.mxu0 0.0
    %460 = vmatprep.subr.mxu0 0.0
    %461 = vmatpush1.xpose.msra.mxu0 0.0
    %462 = vmatprep.subr.mxu0 0.0
    %463 = vmatpush1.xpose.msra.mxu0 0.0
    %464 = vmatprep.subr.mxu0 0.0
    %465 = vmatpush1.xpose.msra.mxu0 0.0
    %466 = vmatprep.subr.mxu0 0.0
    %467 = vmatpush1.xpose.msra.mxu0 0.0
    %468 = vmatprep.subr.mxu0 0.0
    %469 = vmatpush1.xpose.msra.mxu0 0.0
    %470 = vmatprep.subr.mxu0 0.0
    %471 = vmatpush1.xpose.msra.mxu0 0.0
    %472 = vmatprep.subr.mxu0 0.0
    %473 = vmatpush1.xpose.msra.mxu0 0.0
    %474 = vmatprep.subr.mxu0 0.0
    %475 = vmatpush1.xpose.msra.mxu0 0.0
    %476 = vmatprep.subr.mxu0 0.0
    %477 = vmatpush1.xpose.msra.mxu0 0.0
    %478 = vmatprep.subr.mxu0 0.0
    %479 = vmatpush1.xpose.msra.mxu0 0.0
    %480 = vmatprep.subr.mxu0 0.0
    %481 = vmatpush1.xpose.msra.mxu0 0.0
    %482 = vmatprep.subr.mxu0 0.0
    %483 = vmatpush1.xpose.msra.mxu0 0.0
    %484 = vmatprep.subr.mxu0 0.0
    %485 = vmatpush1.xpose.msra.mxu0 0.0
    %486 = vmatprep.subr.mxu0 0.0
    %487 = vmatpush1.xpose.msra.mxu0 0.0
    %488 = vmatprep.subr.mxu0 0.0
    %489 = vmatpush1.xpose.msra.mxu0 0.0
    %490 = vmatprep.subr.mxu0 0.0
    %491 = vmatpush1.xpose.msra.mxu0 0.0
    %492 = vmatprep.subr.mxu0 0.0
    %493 = vmatpush1.xpose.msra.mxu0 0.0
    %494 = vmatprep.subr.mxu0 0.0
    %495 = vmatpush1.xpose.msra.mxu0 0.0
    %496 = vmatprep.subr.mxu0 0.0
    %497 = vmatpush1.xpose.msra.mxu0 0.0
    %498 = vmatprep.subr.mxu0 0.0
    %499 = vmatpush1.xpose.msra.mxu0 0.0
    %500 = vmatprep.subr.mxu0 0.0
    %501 = vmatpush1.xpose.msra.mxu0 0.0
    %502 = vmatprep.subr.mxu0 0.0
    %503 = vmatpush1.xpose.msra.mxu0 0.0
    %504 = vmatprep.mubr.f32.mxu0 0.0
    %505 = vmatmul.mubr.f32.gmra.mrb[0].mxu0 %v436
    %v506 = vpop.f32.mrb[0].mxu0
    %v507 = vadd.f32 0.0, %v506
    %v508 = vpop.f32.mrb[0].mxu0
    %509 = vdwg.mxu0
    %v510 = vsel %vm346, %v507, -inf
    %511 = vmax.xlane.f32.xlu0 %v510
    %v512 = vpop.xlane.xlu0 %511
    %v513 = vsub.f32 %v507, %v512
    %v514 = vmul.f32 %v513, 1.442695
    %v515 = vpow.pop %v514
    %v516 = vsel %vm346, %v515, 0.0
    %517 = vadd.xlane.f32.xlu0 %v516
    %v518 = vpop.xlane.xlu0 %517
    %v519 = vrcp.pop %v518
    %v520 = vmul.f32 %v515, %v519
    %s521 = scalar_lea.vmem [#allocation2], 8
    %522 = vst.msk [vmem:[%s521] sm:$0xff] %vm346, %v520
    %524 = vrot.lane.b32.xlu0 %v266, 126
    %v525 = vpop.permute.xlu0 %524
    %v528 = vsel %vm346, %v520, 0
    %530 = vmatprep.subr.mxu0 0.0
    %531 = vmatpush1.msra.mxu0 %v525
    %532 = vmatprep.subr.mxu0 0.0
    %533 = vmatpush1.msra.mxu0 0.0
    %534 = vmatprep.subr.mxu0 0.0
    %535 = vmatpush1.msra.mxu0 0.0
    %536 = vmatprep.subr.mxu0 0.0
    %537 = vmatpush1.msra.mxu0 0.0
    %538 = vmatprep.subr.mxu0 0.0
    %539 = vmatpush1.msra.mxu0 0.0
    %540 = vmatprep.subr.mxu0 0.0
    %541 = vmatpush1.msra.mxu0 0.0
    %542 = vmatprep.subr.mxu0 0.0
    %543 = vmatpush1.msra.mxu0 0.0
    %544 = vmatprep.subr.mxu0 0.0
    %545 = vmatpush1.msra.mxu0 0.0
    %546 = vmatprep.subr.mxu0 0.0
    %547 = vmatpush1.msra.mxu0 0.0
    %548 = vmatprep.subr.mxu0 0.0
    %549 = vmatpush1.msra.mxu0 0.0
    %550 = vmatprep.subr.mxu0 0.0
    %551 = vmatpush1.msra.mxu0 0.0
    %552 = vmatprep.subr.mxu0 0.0
    %553 = vmatpush1.msra.mxu0 0.0
    %554 = vmatprep.subr.mxu0 0.0
    %555 = vmatpush1.msra.mxu0 0.0
    %556 = vmatprep.subr.mxu0 0.0
    %557 = vmatpush1.msra.mxu0 0.0
    %558 = vmatprep.subr.mxu0 0.0
    %559 = vmatpush1.msra.mxu0 0.0
    %560 = vmatprep.subr.mxu0 0.0
    %561 = vmatpush1.msra.mxu0 0.0
    %562 = vmatprep.subr.mxu0 0.0
    %563 = vmatpush1.msra.mxu0 0.0
    %564 = vmatprep.subr.mxu0 0.0
    %565 = vmatpush1.msra.mxu0 0.0
    %566 = vmatprep.subr.mxu0 0.0
    %567 = vmatpush1.msra.mxu0 0.0
    %568 = vmatprep.subr.mxu0 0.0
    %569 = vmatpush1.msra.mxu0 0.0
    %570 = vmatprep.subr.mxu0 0.0
    %571 = vmatpush1.msra.mxu0 0.0
    %572 = vmatprep.subr.mxu0 0.0
    %573 = vmatpush1.msra.mxu0 0.0
    %574 = vmatprep.subr.mxu0 0.0
    %575 = vmatpush1.msra.mxu0 0.0
    %576 = vmatprep.subr.mxu0 0.0
    %577 = vmatpush1.msra.mxu0 0.0
    %578 = vmatprep.subr.mxu0 0.0
    %579 = vmatpush1.msra.mxu0 0.0
    %580 = vmatprep.subr.mxu0 0.0
    %581 = vmatpush1.msra.mxu0 0.0
    %582 = vmatprep.subr.mxu0 0.0
    %583 = vmatpush1.msra.mxu0 0.0
    %584 = vmatprep.subr.mxu0 0.0
    %585 = vmatpush1.msra.mxu0 0.0
    %586 = vmatprep.subr.mxu0 0.0
    %587 = vmatpush1.msra.mxu0 0.0
    %588 = vmatprep.subr.mxu0 0.0
    %589 = vmatpush1.msra.mxu0 0.0
    %590 = vmatprep.subr.mxu0 0.0
    %591 = vmatpush1.msra.mxu0 0.0
    %592 = vmatprep.subr.mxu0 0.0
    %593 = vmatpush1.msra.mxu0 0.0
    %594 = vmatprep.mubr.f32.mxu0 0.0
    %595 = vmatmul.mubr.f32.gmra.mrb[0].mxu0 %v528
    %v596 = vpop.f32.mrb[0].mxu0
    %v597 = vadd.f32 0.0, %v596
    %v598 = vpop.f32.mrb[0].mxu0
    %599 = vdwg.mxu0
    %601 = vrot.lane.b32.xlu0 %v597, 2
    %v602 = vpop.permute.xlu0 %601
    %v604 = vsel %vm269, %v429, %v602
    %v605 = vlaneseq
    %v606 = vshrl.u32 %v605, 7
    %v607 = vsub.s32 4, %v606
    %v608 = vrot.slane %v23, %v607
    %v610 = vsel %vm29, %v604, 0
    %v613 = vsel %vm33, %v23, 0
    %615 = vmatprep.subr.mxu0 0.0
    %616 = vmatpush1.msra.mxu0 %v613
    %617 = vmatprep.subr.mxu0 0.0
    %618 = vmatpush1.msra.mxu0 0.0
    %619 = vmatprep.subr.mxu0 0.0
    %620 = vmatpush1.msra.mxu0 0.0
    %621 = vmatprep.subr.mxu0 0.0
    %622 = vmatpush1.msra.mxu0 0.0
    %623 = vmatprep.subr.mxu0 0.0
    %624 = vmatpush1.msra.mxu0 0.0
    %625 = vmatprep.subr.mxu0 0.0
    %626 = vmatpush1.msra.mxu0 0.0
    %627 = vmatprep.subr.mxu0 0.0
    %628 = vmatpush1.msra.mxu0 0.0
    %629 = vmatprep.subr.mxu0 0.0
    %630 = vmatpush1.msra.mxu0 0.0
    %631 = vmatprep.subr.mxu0 0.0
    %632 = vmatpush1.msra.mxu0 0.0
    %633 = vmatprep.subr.mxu0 0.0
    %634 = vmatpush1.msra.mxu0 0.0
    %635 = vmatprep.subr.mxu0 0.0
    %636 = vmatpush1.msra.mxu0 0.0
    %637 = vmatprep.subr.mxu0 0.0
    %638 = vmatpush1.msra.mxu0 0.0
    %639 = vmatprep.subr.mxu0 0.0
    %640 = vmatpush1.msra.mxu0 0.0
    %641 = vmatprep.subr.mxu0 0.0
    %642 = vmatpush1.msra.mxu0 0.0
    %643 = vmatprep.subr.mxu0 0.0
    %644 = vmatpush1.msra.mxu0 0.0
    %645 = vmatprep.subr.mxu0 0.0
    %646 = vmatpush1.msra.mxu0 0.0
    %647 = vmatprep.subr.mxu0 0.0
    %648 = vmatpush1.msra.mxu0 0.0
    %649 = vmatprep.subr.mxu0 0.0
    %650 = vmatpush1.msra.mxu0 0.0
    %651 = vmatprep.subr.mxu0 0.0
    %652 = vmatpush1.msra.mxu0 0.0
    %653 = vmatprep.subr.mxu0 0.0
    %654 = vmatpush1.msra.mxu0 0.0
    %655 = vmatprep.subr.mxu0 0.0
    %656 = vmatpush1.msra.mxu0 0.0
    %657 = vmatprep.subr.mxu0 0.0
    %658 = vmatpush1.msra.mxu0 0.0
    %659 = vmatprep.subr.mxu0 0.0
    %660 = vmatpush1.msra.mxu0 0.0
    %661 = vmatprep.subr.mxu0 0.0
    %662 = vmatpush1.msra.mxu0 0.0
    %663 = vmatprep.subr.mxu0 0.0
    %664 = vmatpush1.msra.mxu0 0.0
    %665 = vmatprep.subr.mxu0 0.0
    %666 = vmatpush1.msra.mxu0 0.0
    %667 = vmatprep.subr.mxu0 0.0
    %668 = vmatpush1.msra.mxu0 0.0
    %669 = vmatprep.subr.mxu0 0.0
    %670 = vmatpush1.msra.mxu0 0.0
    %671 = vmatprep.subr.mxu0 0.0
    %672 = vmatpush1.msra.mxu0 0.0
    %673 = vmatprep.subr.mxu0 0.0
    %674 = vmatpush1.msra.mxu0 0.0
    %675 = vmatprep.subr.mxu0 0.0
    %676 = vmatpush1.msra.mxu0 0.0
    %677 = vmatprep.subr.mxu0 0.0
    %678 = vmatpush1.msra.mxu0 0.0
    %679 = vmatprep.mubr.f32.mxu0 0.0
    %680 = vmatmul.mubr.f32.gmra.mrb[0].mxu0 %v610
    %v681 = vpop.f32.mrb[0].mxu0
    %v682 = vadd.f32 %v608, %v681
    %v683 = vpop.f32.mrb[0].mxu0
    %684 = vdwg.mxu0
    %685 = vst.msk [vmem:[%s4] sm:$0xff] %vm29, %v682
    %s686 = scalar_lea.vmem %s0, 8
    %v687 = vld [vmem:[%s686] sm:$0xff]
    %v689 = vsel %vm29, %v687, 0
    %691 = vmatprep.subr.mxu0 0.0
    %692 = vmatpush1.msra.mxu0 %v35
    %693 = vmatprep.subr.mxu0 0.0
    %694 = vmatpush1.msra.mxu0 0.0
    %695 = vmatprep.subr.mxu0 0.0
    %696 = vmatpush1.msra.mxu0 0.0
    %697 = vmatprep.subr.mxu0 0.0
    %698 = vmatpush1.msra.mxu0 0.0
    %699 = vmatprep.subr.mxu0 0.0
    %700 = vmatpush1.msra.mxu0 0.0
    %701 = vmatprep.subr.mxu0 0.0
    %702 = vmatpush1.msra.mxu0 0.0
    %703 = vmatprep.subr.mxu0 0.0
    %704 = vmatpush1.msra.mxu0 0.0
    %705 = vmatprep.subr.mxu0 0.0
    %706 = vmatpush1.msra.mxu0 0.0
    %707 = vmatprep.subr.mxu0 0.0
    %708 = vmatpush1.msra.mxu0 0.0
    %709 = vmatprep.subr.mxu0 0.0
    %710 = vmatpush1.msra.mxu0 0.0
    %711 = vmatprep.subr.mxu0 0.0
    %712 = vmatpush1.msra.mxu0 0.0
    %713 = vmatprep.subr.mxu0 0.0
    %714 = vmatpush1.msra.mxu0 0.0
    %715 = vmatprep.subr.mxu0 0.0
    %716 = vmatpush1.msra.mxu0 0.0
    %717 = vmatprep.subr.mxu0 0.0
    %718 = vmatpush1.msra.mxu0 0.0
    %719 = vmatprep.subr.mxu0 0.0
    %720 = vmatpush1.msra.mxu0 0.0
    %721 = vmatprep.subr.mxu0 0.0
    %722 = vmatpush1.msra.mxu0 0.0
    %723 = vmatprep.subr.mxu0 0.0
    %724 = vmatpush1.msra.mxu0 0.0
    %725 = vmatprep.subr.mxu0 0.0
    %726 = vmatpush1.msra.mxu0 0.0
    %727 = vmatprep.subr.mxu0 0.0
    %728 = vmatpush1.msra.mxu0 0.0
    %729 = vmatprep.subr.mxu0 0.0
    %730 = vmatpush1.msra.mxu0 0.0
    %731 = vmatprep.subr.mxu0 0.0
    %732 = vmatpush1.msra.mxu0 0.0
    %733 = vmatprep.subr.mxu0 0.0
    %734 = vmatpush1.msra.mxu0 0.0
    %735 = vmatprep.subr.mxu0 0.0
    %736 = vmatpush1.msra.mxu0 0.0
    %737 = vmatprep.subr.mxu0 0.0
    %738 = vmatpush1.msra.mxu0 0.0
    %739 = vmatprep.subr.mxu0 0.0
    %740 = vmatpush1.msra.mxu0 0.0
    %741 = vmatprep.subr.mxu0 0.0
    %742 = vmatpush1.msra.mxu0 0.0
    %743 = vmatprep.subr.mxu0 0.0
    %744 = vmatpush1.msra.mxu0 0.0
    %745 = vmatprep.subr.mxu0 0.0
    %746 = vmatpush1.msra.mxu0 0.0
    %747 = vmatprep.subr.mxu0 0.0
    %748 = vmatpush1.msra.mxu0 0.0
    %749 = vmatprep.subr.mxu0 0.0
    %750 = vmatpush1.msra.mxu0 0.0
    %751 = vmatprep.subr.mxu0 0.0
    %752 = vmatpush1.msra.mxu0 0.0
    %753 = vmatprep.subr.mxu0 0.0
    %754 = vmatpush1.msra.mxu0 0.0
    %755 = vmatprep.mubr.f32.mxu0 0.0
    %756 = vmatmul.mubr.f32.gmra.mrb[0].mxu0 %v689
    %v757 = vpop.f32.mrb[0].mxu0
    %v758 = vadd.f32 %v28, %v757
    %v759 = vpop.f32.mrb[0].mxu0
    %760 = vdwg.mxu0
    %s761 = scalar_lea.vmem %s1, 8
    %v762 = vld [vmem:[%s761] sm:$0xff]
    %v764 = vsel %vm29, %v762, 0
    %766 = vmatprep.subr.mxu0 0.0
    %767 = vmatpush1.msra.mxu0 %v116
    %768 = vmatprep.subr.mxu0 0.0
    %769 = vmatpush1.msra.mxu0 0.0
    %770 = vmatprep.subr.mxu0 0.0
    %771 = vmatpush1.msra.mxu0 0.0
    %772 = vmatprep.subr.mxu0 0.0
    %773 = vmatpush1.msra.mxu0 0.0
    %774 = vmatprep.subr.mxu0 0.0
    %775 = vmatpush1.msra.mxu0 0.0
    %776 = vmatprep.subr.mxu0 0.0
    %777 = vmatpush1.msra.mxu0 0.0
    %778 = vmatprep.subr.mxu0 0.0
    %779 = vmatpush1.msra.mxu0 0.0
    %780 = vmatprep.subr.mxu0 0.0
    %781 = vmatpush1.msra.mxu0 0.0
    %782 = vmatprep.subr.mxu0 0.0
    %783 = vmatpush1.msra.mxu0 0.0
    %784 = vmatprep.subr.mxu0 0.0
    %785 = vmatpush1.msra.mxu0 0.0
    %786 = vmatprep.subr.mxu0 0.0
    %787 = vmatpush1.msra.mxu0 0.0
    %788 = vmatprep.subr.mxu0 0.0
    %789 = vmatpush1.msra.mxu0 0.0
    %790 = vmatprep.subr.mxu0 0.0
    %791 = vmatpush1.msra.mxu0 0.0
    %792 = vmatprep.subr.mxu0 0.0
    %793 = vmatpush1.msra.mxu0 0.0
    %794 = vmatprep.subr.mxu0 0.0
    %795 = vmatpush1.msra.mxu0 0.0
    %796 = vmatprep.subr.mxu0 0.0
    %797 = vmatpush1.msra.mxu0 0.0
    %798 = vmatprep.subr.mxu0 0.0
    %799 = vmatpush1.msra.mxu0 0.0
    %800 = vmatprep.subr.mxu0 0.0
    %801 = vmatpush1.msra.mxu0 0.0
    %802 = vmatprep.subr.mxu0 0.0
    %803 = vmatpush1.msra.mxu0 0.0
    %804 = vmatprep.subr.mxu0 0.0
    %805 = vmatpush1.msra.mxu0 0.0
    %806 = vmatprep.subr.mxu0 0.0
    %807 = vmatpush1.msra.mxu0 0.0
    %808 = vmatprep.subr.mxu0 0.0
    %809 = vmatpush1.msra.mxu0 0.0
    %810 = vmatprep.subr.mxu0 0.0
    %811 = vmatpush1.msra.mxu0 0.0
    %812 = vmatprep.subr.mxu0 0.0
    %813 = vmatpush1.msra.mxu0 0.0
    %814 = vmatprep.subr.mxu0 0.0
    %815 = vmatpush1.msra.mxu0 0.0
    %816 = vmatprep.subr.mxu0 0.0
    %817 = vmatpush1.msra.mxu0 0.0
    %818 = vmatprep.subr.mxu0 0.0
    %819 = vmatpush1.msra.mxu0 0.0
    %820 = vmatprep.subr.mxu0 0.0
    %821 = vmatpush1.msra.mxu0 0.0
    %822 = vmatprep.subr.mxu0 0.0
    %823 = vmatpush1.msra.mxu0 0.0
    %824 = vmatprep.subr.mxu0 0.0
    %825 = vmatpush1.msra.mxu0 0.0
    %826 = vmatprep.subr.mxu0 0.0
    %827 = vmatpush1.msra.mxu0 0.0
    %828 = vmatprep.subr.mxu0 0.0
    %829 = vmatpush1.msra.mxu0 0.0
    %830 = vmatprep.mubr.f32.mxu0 0.0
    %831 = vmatmul.mubr.f32.gmra.mrb[0].mxu0 %v764
    %v832 = vpop.f32.mrb[0].mxu0
    %v833 = vadd.f32 %v111, %v832
    %v834 = vpop.f32.mrb[0].mxu0
    %835 = vdwg.mxu0
    %s836 = scalar_lea.vmem %s2, 8
    %v837 = vld [vmem:[%s836] sm:$0xff]
    %v839 = vsel %vm29, %v837, 0
    %841 = vmatprep.subr.mxu0 0.0
    %842 = vmatpush1.msra.mxu0 %v197
    %843 = vmatprep.subr.mxu0 0.0
    %844 = vmatpush1.msra.mxu0 0.0
    %845 = vmatprep.subr.mxu0 0.0
    %846 = vmatpush1.msra.mxu0 0.0
    %847 = vmatprep.subr.mxu0 0.0
    %848 = vmatpush1.msra.mxu0 0.0
    %849 = vmatprep.subr.mxu0 0.0
    %850 = vmatpush1.msra.mxu0 0.0
    %851 = vmatprep.subr.mxu0 0.0
    %852 = vmatpush1.msra.mxu0 0.0
    %853 = vmatprep.subr.mxu0 0.0
    %854 = vmatpush1.msra.mxu0 0.0
    %855 = vmatprep.subr.mxu0 0.0
    %856 = vmatpush1.msra.mxu0 0.0
    %857 = vmatprep.subr.mxu0 0.0
    %858 = vmatpush1.msra.mxu0 0.0
    %859 = vmatprep.subr.mxu0 0.0
    %860 = vmatpush1.msra.mxu0 0.0
    %861 = vmatprep.subr.mxu0 0.0
    %862 = vmatpush1.msra.mxu0 0.0
    %863 = vmatprep.subr.mxu0 0.0
    %864 = vmatpush1.msra.mxu0 0.0
    %865 = vmatprep.subr.mxu0 0.0
    %866 = vmatpush1.msra.mxu0 0.0
    %867 = vmatprep.subr.mxu0 0.0
    %868 = vmatpush1.msra.mxu0 0.0
    %869 = vmatprep.subr.mxu0 0.0
    %870 = vmatpush1.msra.mxu0 0.0
    %871 = vmatprep.subr.mxu0 0.0
    %872 = vmatpush1.msra.mxu0 0.0
    %873 = vmatprep.subr.mxu0 0.0
    %874 = vmatpush1.msra.mxu0 0.0
    %875 = vmatprep.subr.mxu0 0.0
    %876 = vmatpush1.msra.mxu0 0.0
    %877 = vmatprep.subr.mxu0 0.0
    %878 = vmatpush1.msra.mxu0 0.0
    %879 = vmatprep.subr.mxu0 0.0
    %880 = vmatpush1.msra.mxu0 0.0
    %881 = vmatprep.subr.mxu0 0.0
    %882 = vmatpush1.msra.mxu0 0.0
    %883 = vmatprep.subr.mxu0 0.0
    %884 = vmatpush1.msra.mxu0 0.0
    %885 = vmatprep.subr.mxu0 0.0
    %886 = vmatpush1.msra.mxu0 0.0
    %887 = vmatprep.subr.mxu0 0.0
    %888 = vmatpush1.msra.mxu0 0.0
    %889 = vmatprep.subr.mxu0 0.0
    %890 = vmatpush1.msra.mxu0 0.0
    %891 = vmatprep.subr.mxu0 0.0
    %892 = vmatpush1.msra.mxu0 0.0
    %893 = vmatprep.subr.mxu0 0.0
    %894 = vmatpush1.msra.mxu0 0.0
    %895 = vmatprep.subr.mxu0 0.0
    %896 = vmatpush1.msra.mxu0 0.0
    %897 = vmatprep.subr.mxu0 0.0
    %898 = vmatpush1.msra.mxu0 0.0
    %899 = vmatprep.subr.mxu0 0.0
    %900 = vmatpush1.msra.mxu0 0.0
    %901 = vmatprep.subr.mxu0 0.0
    %902 = vmatpush1.msra.mxu0 0.0
    %903 = vmatprep.subr.mxu0 0.0
    %904 = vmatpush1.msra.mxu0 0.0
    %905 = vmatprep.mubr.f32.mxu0 0.0
    %906 = vmatmul.mubr.f32.gmra.mrb[0].mxu0 %v839
    %v907 = vpop.f32.mrb[0].mxu0
    %v908 = vadd.f32 %v192, %v907
    %v909 = vpop.f32.mrb[0].mxu0
    %910 = vdwg.mxu0
    %v912 = vsel %vm269, %v758, 0
    %v915 = vsel %vm269, %v833, 0
    %917 = vmatprep.subr.mxu0 0.0
    %918 = vmatpush1.xpose.msra.mxu0 %v915
    %919 = vmatprep.subr.mxu0 0.0
    %920 = vmatpush1.xpose.msra.mxu0 0.0
    %921 = vmatprep.subr.mxu0 0.0
    %922 = vmatpush1.xpose.msra.mxu0 0.0
    %923 = vmatprep.subr.mxu0 0.0
    %924 = vmatpush1.xpose.msra.mxu0 0.0
    %925 = vmatprep.subr.mxu0 0.0
    %926 = vmatpush1.xpose.msra.mxu0 0.0
    %927 = vmatprep.subr.mxu0 0.0
    %928 = vmatpush1.xpose.msra.mxu0 0.0
    %929 = vmatprep.subr.mxu0 0.0
    %930 = vmatpush1.xpose.msra.mxu0 0.0
    %931 = vmatprep.subr.mxu0 0.0
    %932 = vmatpush1.xpose.msra.mxu0 0.0
    %933 = vmatprep.subr.mxu0 0.0
    %934 = vmatpush1.xpose.msra.mxu0 0.0
    %935 = vmatprep.subr.mxu0 0.0
    %936 = vmatpush1.xpose.msra.mxu0 0.0
    %937 = vmatprep.subr.mxu0 0.0
    %938 = vmatpush1.xpose.msra.mxu0 0.0
    %939 = vmatprep.subr.mxu0 0.0
    %940 = vmatpush1.xpose.msra.mxu0 0.0
    %941 = vmatprep.subr.mxu0 0.0
    %942 = vmatpush1.xpose.msra.mxu0 0.0
    %943 = vmatprep.subr.mxu0 0.0
    %944 = vmatpush1.xpose.msra.mxu0 0.0
    %945 = vmatprep.subr.mxu0 0.0
    %946 = vmatpush1.xpose.msra.mxu0 0.0
    %947 = vmatprep.subr.mxu0 0.0
    %948 = vmatpush1.xpose.msra.mxu0 0.0
    %949 = vmatprep.subr.mxu0 0.0
    %950 = vmatpush1.xpose.msra.mxu0 0.0
    %951 = vmatprep.subr.mxu0 0.0
    %952 = vmatpush1.xpose.msra.mxu0 0.0
    %953 = vmatprep.subr.mxu0 0.0
    %954 = vmatpush1.xpose.msra.mxu0 0.0
    %955 = vmatprep.subr.mxu0 0.0
    %956 = vmatpush1.xpose.msra.mxu0 0.0
    %957 = vmatprep.subr.mxu0 0.0
    %958 = vmatpush1.xpose.msra.mxu0 0.0
    %959 = vmatprep.subr.mxu0 0.0
    %960 = vmatpush1.xpose.msra.mxu0 0.0
    %961 = vmatprep.subr.mxu0 0.0
    %962 = vmatpush1.xpose.msra.mxu0 0.0
    %963 = vmatprep.subr.mxu0 0.0
    %964 = vmatpush1.xpose.msra.mxu0 0.0
    %965 = vmatprep.subr.mxu0 0.0
    %966 = vmatpush1.xpose.msra.mxu0 0.0
    %967 = vmatprep.subr.mxu0 0.0
    %968 = vmatpush1.xpose.msra.mxu0 0.0
    %969 = vmatprep.subr.mxu0 0.0
    %970 = vmatpush1.xpose.msra.mxu0 0.0
    %971 = vmatprep.subr.mxu0 0.0
    %972 = vmatpush1.xpose.msra.mxu0 0.0
    %973 = vmatprep.subr.mxu0 0.0
    %974 = vmatpush1.xpose.msra.mxu0 0.0
    %975 = vmatprep.subr.mxu0 0.0
    %976 = vmatpush1.xpose.msra.mxu0 0.0
    %977 = vmatprep.subr.mxu0 0.0
    %978 = vmatpush1.xpose.msra.mxu0 0.0
    %979 = vmatprep.subr.mxu0 0.0
    %980 = vmatpush1.xpose.msra.mxu0 0.0
    %981 = vmatprep.mubr.f32.mxu0 0.0
    %982 = vmatmul.mubr.f32.gmra.mrb[0].mxu0 %v912
    %v983 = vpop.f32.mrb[0].mxu0
    %v984 = vadd.f32 0.0, %v983
    %v985 = vpop.f32.mrb[0].mxu0
    %986 = vdwg.mxu0
    %v987 = vsel %vm346, %v984, -inf
    %988 = vmax.xlane.f32.xlu0 %v987
    %v989 = vpop.xlane.xlu0 %988
    %v990 = vsub.f32 %v984, %v989
    %v991 = vmul.f32 %v990, 1.442695
    %v992 = vpow.pop %v991
    %v993 = vsel %vm346, %v992, 0.0
    %994 = vadd.xlane.f32.xlu0 %v993
    %v995 = vpop.xlane.xlu0 %994
    %v996 = vrcp.pop %v995
    %v997 = vmul.f32 %v992, %v996
    %s998 = scalar_lea.vmem [#allocation2], 16
    %999 = vst.msk [vmem:[%s998] sm:$0xff] %vm346, %v997
    %v1001 = vsel %vm346, %v997, 0
    %1003 = vmatprep.subr.mxu0 0.0
    %1004 = vmatpush1.msra.mxu0 %v908
    %1005 = vmatprep.subr.mxu0 0.0
    %1006 = vmatpush1.msra.mxu0 0.0
    %1007 = vmatprep.subr.mxu0 0.0
    %1008 = vmatpush1.msra.mxu0 0.0
    %1009 = vmatprep.subr.mxu0 0.0
    %1010 = vmatpush1.msra.mxu0 0.0
    %1011 = vmatprep.subr.mxu0 0.0
    %1012 = vmatpush1.msra.mxu0 0.0
    %1013 = vmatprep.subr.mxu0 0.0
    %1014 = vmatpush1.msra.mxu0 0.0
    %1015 = vmatprep.subr.mxu0 0.0
    %1016 = vmatpush1.msra.mxu0 0.0
    %1017 = vmatprep.subr.mxu0 0.0
    %1018 = vmatpush1.msra.mxu0 0.0
    %1019 = vmatprep.subr.mxu0 0.0
    %1020 = vmatpush1.msra.mxu0 0.0
    %1021 = vmatprep.subr.mxu0 0.0
    %1022 = vmatpush1.msra.mxu0 0.0
    %1023 = vmatprep.subr.mxu0 0.0
    %1024 = vmatpush1.msra.mxu0 0.0
    %1025 = vmatprep.subr.mxu0 0.0
    %1026 = vmatpush1.msra.mxu0 0.0
    %1027 = vmatprep.subr.mxu0 0.0
    %1028 = vmatpush1.msra.mxu0 0.0
    %1029 = vmatprep.subr.mxu0 0.0
    %1030 = vmatpush1.msra.mxu0 0.0
    %1031 = vmatprep.subr.mxu0 0.0
    %1032 = vmatpush1.msra.mxu0 0.0
    %1033 = vmatprep.subr.mxu0 0.0
    %1034 = vmatpush1.msra.mxu0 0.0
    %1035 = vmatprep.subr.mxu0 0.0
    %1036 = vmatpush1.msra.mxu0 0.0
    %1037 = vmatprep.subr.mxu0 0.0
    %1038 = vmatpush1.msra.mxu0 0.0
    %1039 = vmatprep.subr.mxu0 0.0
    %1040 = vmatpush1.msra.mxu0 0.0
    %1041 = vmatprep.subr.mxu0 0.0
    %1042 = vmatpush1.msra.mxu0 0.0
    %1043 = vmatprep.subr.mxu0 0.0
    %1044 = vmatpush1.msra.mxu0 0.0
    %1045 = vmatprep.subr.mxu0 0.0
    %1046 = vmatpush1.msra.mxu0 0.0
    %1047 = vmatprep.subr.mxu0 0.0
    %1048 = vmatpush1.msra.mxu0 0.0
    %1049 = vmatprep.subr.mxu0 0.0
    %1050 = vmatpush1.msra.mxu0 0.0
    %1051 = vmatprep.subr.mxu0 0.0
    %1052 = vmatpush1.msra.mxu0 0.0
    %1053 = vmatprep.subr.mxu0 0.0
    %1054 = vmatpush1.msra.mxu0 0.0
    %1055 = vmatprep.subr.mxu0 0.0
    %1056 = vmatpush1.msra.mxu0 0.0
    %1057 = vmatprep.subr.mxu0 0.0
    %1058 = vmatpush1.msra.mxu0 0.0
    %1059 = vmatprep.subr.mxu0 0.0
    %1060 = vmatpush1.msra.mxu0 0.0
    %1061 = vmatprep.subr.mxu0 0.0
    %1062 = vmatpush1.msra.mxu0 0.0
    %1063 = vmatprep.subr.mxu0 0.0
    %1064 = vmatpush1.msra.mxu0 0.0
    %1065 = vmatprep.subr.mxu0 0.0
    %1066 = vmatpush1.msra.mxu0 0.0
    %1067 = vmatprep.mubr.f32.mxu0 0.0
    %1068 = vmatmul.mubr.f32.gmra.mrb[0].mxu0 %v1001
    %v1069 = vpop.f32.mrb[0].mxu0
    %v1070 = vadd.f32 0.0, %v1069
    %v1071 = vpop.f32.mrb[0].mxu0
    %1072 = vdwg.mxu0
    %1073 = vrot.lane.b32.xlu0 %v758, 126
    %v1074 = vpop.permute.xlu0 %1073
    %1075 = vrot.lane.b32.xlu0 %v833, 126
    %v1076 = vpop.permute.xlu0 %1075
    %v1077 = vsel %vm269, %v1074, 0
    %v1079 = vsel %vm269, %v1076, 0
    %1081 = vmatprep.subr.mxu0 0.0
    %1082 = vmatpush1.xpose.msra.mxu0 %v1079
    %1083 = vmatprep.subr.mxu0 0.0
    %1084 = vmatpush1.xpose.msra.mxu0 0.0
    %1085 = vmatprep.subr.mxu0 0.0
    %1086 = vmatpush1.xpose.msra.mxu0 0.0
    %1087 = vmatprep.subr.mxu0 0.0
    %1088 = vmatpush1.xpose.msra.mxu0 0.0
    %1089 = vmatprep.subr.mxu0 0.0
    %1090 = vmatpush1.xpose.msra.mxu0 0.0
    %1091 = vmatprep.subr.mxu0 0.0
    %1092 = vmatpush1.xpose.msra.mxu0 0.0
    %1093 = vmatprep.subr.mxu0 0.0
    %1094 = vmatpush1.xpose.msra.mxu0 0.0
    %1095 = vmatprep.subr.mxu0 0.0
    %1096 = vmatpush1.xpose.msra.mxu0 0.0
    %1097 = vmatprep.subr.mxu0 0.0
    %1098 = vmatpush1.xpose.msra.mxu0 0.0
    %1099 = vmatprep.subr.mxu0 0.0
    %1100 = vmatpush1.xpose.msra.mxu0 0.0
    %1101 = vmatprep.subr.mxu0 0.0
    %1102 = vmatpush1.xpose.msra.mxu0 0.0
    %1103 = vmatprep.subr.mxu0 0.0
    %1104 = vmatpush1.xpose.msra.mxu0 0.0
    %1105 = vmatprep.subr.mxu0 0.0
    %1106 = vmatpush1.xpose.msra.mxu0 0.0
    %1107 = vmatprep.subr.mxu0 0.0
    %1108 = vmatpush1.xpose.msra.mxu0 0.0
    %1109 = vmatprep.subr.mxu0 0.0
    %1110 = vmatpush1.xpose.msra.mxu0 0.0
    %1111 = vmatprep.subr.mxu0 0.0
    %1112 = vmatpush1.xpose.msra.mxu0 0.0
    %1113 = vmatprep.subr.mxu0 0.0
    %1114 = vmatpush1.xpose.msra.mxu0 0.0
    %1115 = vmatprep.subr.mxu0 0.0
    %1116 = vmatpush1.xpose.msra.mxu0 0.0
    %1117 = vmatprep.subr.mxu0 0.0
    %1118 = vmatpush1.xpose.msra.mxu0 0.0
    %1119 = vmatprep.subr.mxu0 0.0
    %1120 = vmatpush1.xpose.msra.mxu0 0.0
    %1121 = vmatprep.subr.mxu0 0.0
    %1122 = vmatpush1.xpose.msra.mxu0 0.0
    %1123 = vmatprep.subr.mxu0 0.0
    %1124 = vmatpush1.xpose.msra.mxu0 0.0
    %1125 = vmatprep.subr.mxu0 0.0
    %1126 = vmatpush1.xpose.msra.mxu0 0.0
    %1127 = vmatprep.subr.mxu0 0.0
    %1128 = vmatpush1.xpose.msra.mxu0 0.0
    %1129 = vmatprep.subr.mxu0 0.0
    %1130 = vmatpush1.xpose.msra.mxu0 0.0
    %1131 = vmatprep.subr.mxu0 0.0
    %1132 = vmatpush1.xpose.msra.mxu0 0.0
    %1133 = vmatprep.subr.mxu0 0.0
    %1134 = vmatpush1.xpose.msra.mxu0 0.0
    %1135 = vmatprep.subr.mxu0 0.0
    %1136 = vmatpush1.xpose.msra.mxu0 0.0
    %1137 = vmatprep.subr.mxu0 0.0
    %1138 = vmatpush1.xpose.msra.mxu0 0.0
    %1139 = vmatprep.subr.mxu0 0.0
    %1140 = vmatpush1.xpose.msra.mxu0 0.0
    %1141 = vmatprep.subr.mxu0 0.0
    %1142 = vmatpush1.xpose.msra.mxu0 0.0
    %1143 = vmatprep.subr.mxu0 0.0
    %1144 = vmatpush1.xpose.msra.mxu0 0.0
    %1145 = vmatprep.mubr.f32.mxu0 0.0
    %1146 = vmatmul.mubr.f32.gmra.mrb[0].mxu0 %v1077
    %v1147 = vpop.f32.mrb[0].mxu0
    %v1148 = vadd.f32 0.0, %v1147
    %v1149 = vpop.f32.mrb[0].mxu0
    %1150 = vdwg.mxu0
    %v1151 = vsel %vm346, %v1148, -inf
    %1152 = vmax.xlane.f32.xlu0 %v1151
    %v1153 = vpop.xlane.xlu0 %1152
    %v1154 = vsub.f32 %v1148, %v1153
    %v1155 = vmul.f32 %v1154, 1.442695
    %v1156 = vpow.pop %v1155
    %v1157 = vsel %vm346, %v1156, 0.0
    %1158 = vadd.xlane.f32.xlu0 %v1157
    %v1159 = vpop.xlane.xlu0 %1158
    %v1160 = vrcp.pop %v1159
    %v1161 = vmul.f32 %v1156, %v1160
    %s1162 = scalar_lea.vmem [#allocation2], 24
    %1163 = vst.msk [vmem:[%s1162] sm:$0xff] %vm346, %v1161
    %1165 = vrot.lane.b32.xlu0 %v908, 126
    %v1166 = vpop.permute.xlu0 %1165
    %v1169 = vsel %vm346, %v1161, 0
    %1171 = vmatprep.subr.mxu0 0.0
    %1172 = vmatpush1.msra.mxu0 %v1166
    %1173 = vmatprep.subr.mxu0 0.0
    %1174 = vmatpush1.msra.mxu0 0.0
    %1175 = vmatprep.subr.mxu0 0.0
    %1176 = vmatpush1.msra.mxu0 0.0
    %1177 = vmatprep.subr.mxu0 0.0
    %1178 = vmatpush1.msra.mxu0 0.0
    %1179 = vmatprep.subr.mxu0 0.0
    %1180 = vmatpush1.msra.mxu0 0.0
    %1181 = vmatprep.subr.mxu0 0.0
    %1182 = vmatpush1.msra.mxu0 0.0
    %1183 = vmatprep.subr.mxu0 0.0
    %1184 = vmatpush1.msra.mxu0 0.0
    %1185 = vmatprep.subr.mxu0 0.0
    %1186 = vmatpush1.msra.mxu0 0.0
    %1187 = vmatprep.subr.mxu0 0.0
    %1188 = vmatpush1.msra.mxu0 0.0
    %1189 = vmatprep.subr.mxu0 0.0
    %1190 = vmatpush1.msra.mxu0 0.0
    %1191 = vmatprep.subr.mxu0 0.0
    %1192 = vmatpush1.msra.mxu0 0.0
    %1193 = vmatprep.subr.mxu0 0.0
    %1194 = vmatpush1.msra.mxu0 0.0
    %1195 = vmatprep.subr.mxu0 0.0
    %1196 = vmatpush1.msra.mxu0 0.0
    %1197 = vmatprep.subr.mxu0 0.0
    %1198 = vmatpush1.msra.mxu0 0.0
    %1199 = vmatprep.subr.mxu0 0.0
    %1200 = vmatpush1.msra.mxu0 0.0
    %1201 = vmatprep.subr.mxu0 0.0
    %1202 = vmatpush1.msra.mxu0 0.0
    %1203 = vmatprep.subr.mxu0 0.0
    %1204 = vmatpush1.msra.mxu0 0.0
    %1205 = vmatprep.subr.mxu0 0.0
    %1206 = vmatpush1.msra.mxu0 0.0
    %1207 = vmatprep.subr.mxu0 0.0
    %1208 = vmatpush1.msra.mxu0 0.0
    %1209 = vmatprep.subr.mxu0 0.0
    %1210 = vmatpush1.msra.mxu0 0.0
    %1211 = vmatprep.subr.mxu0 0.0
    %1212 = vmatpush1.msra.mxu0 0.0
    %1213 = vmatprep.subr.mxu0 0.0
    %1214 = vmatpush1.msra.mxu0 0.0
    %1215 = vmatprep.subr.mxu0 0.0
    %1216 = vmatpush1.msra.mxu0 0.0
    %1217 = vmatprep.subr.mxu0 0.0
    %1218 = vmatpush1.msra.mxu0 0.0
    %1219 = vmatprep.subr.mxu0 0.0
    %1220 = vmatpush1.msra.mxu0 0.0
    %1221 = vmatprep.subr.mxu0 0.0
    %1222 = vmatpush1.msra.mxu0 0.0
    %1223 = vmatprep.subr.mxu0 0.0
    %1224 = vmatpush1.msra.mxu0 0.0
    %1225 = vmatprep.subr.mxu0 0.0
    %1226 = vmatpush1.msra.mxu0 0.0
    %1227 = vmatprep.subr.mxu0 0.0
    %1228 = vmatpush1.msra.mxu0 0.0
    %1229 = vmatprep.subr.mxu0 0.0
    %1230 = vmatpush1.msra.mxu0 0.0
    %1231 = vmatprep.subr.mxu0 0.0
    %1232 = vmatpush1.msra.mxu0 0.0
    %1233 = vmatprep.subr.mxu0 0.0
    %1234 = vmatpush1.msra.mxu0 0.0
    %1235 = vmatprep.mubr.f32.mxu0 0.0
    %1236 = vmatmul.mubr.f32.gmra.mrb[0].mxu0 %v1169
    %v1237 = vpop.f32.mrb[0].mxu0
    %v1238 = vadd.f32 0.0, %v1237
    %v1239 = vpop.f32.mrb[0].mxu0
    %1240 = vdwg.mxu0
    %1242 = vrot.lane.b32.xlu0 %v1238, 2
    %v1243 = vpop.permute.xlu0 %1242
    %v1245 = vsel %vm269, %v1070, %v1243
    %v1247 = vsel %vm29, %v1245, 0
    %1249 = vmatprep.subr.mxu0 0.0
    %1250 = vmatpush1.msra.mxu0 %v613
    %1251 = vmatprep.subr.mxu0 0.0
    %1252 = vmatpush1.msra.mxu0 0.0
    %1253 = vmatprep.subr.mxu0 0.0
    %1254 = vmatpush1.msra.mxu0 0.0
    %1255 = vmatprep.subr.mxu0 0.0
    %1256 = vmatpush1.msra.mxu0 0.0
    %1257 = vmatprep.subr.mxu0 0.0
    %1258 = vmatpush1.msra.mxu0 0.0
    %1259 = vmatprep.subr.mxu0 0.0
    %1260 = vmatpush1.msra.mxu0 0.0
    %1261 = vmatprep.subr.mxu0 0.0
    %1262 = vmatpush1.msra.mxu0 0.0
    %1263 = vmatprep.subr.mxu0 0.0
    %1264 = vmatpush1.msra.mxu0 0.0
    %1265 = vmatprep.subr.mxu0 0.0
    %1266 = vmatpush1.msra.mxu0 0.0
    %1267 = vmatprep.subr.mxu0 0.0
    %1268 = vmatpush1.msra.mxu0 0.0
    %1269 = vmatprep.subr.mxu0 0.0
    %1270 = vmatpush1.msra.mxu0 0.0
    %1271 = vmatprep.subr.mxu0 0.0
    %1272 = vmatpush1.msra.mxu0 0.0
    %1273 = vmatprep.subr.mxu0 0.0
    %1274 = vmatpush1.msra.mxu0 0.0
    %1275 = vmatprep.subr.mxu0 0.0
    %1276 = vmatpush1.msra.mxu0 0.0
    %1277 = vmatprep.subr.mxu0 0.0
    %1278 = vmatpush1.msra.mxu0 0.0
    %1279 = vmatprep.subr.mxu0 0.0
    %1280 = vmatpush1.msra.mxu0 0.0
    %1281 = vmatprep.subr.mxu0 0.0
    %1282 = vmatpush1.msra.mxu0 0.0
    %1283 = vmatprep.subr.mxu0 0.0
    %1284 = vmatpush1.msra.mxu0 0.0
    %1285 = vmatprep.subr.mxu0 0.0
    %1286 = vmatpush1.msra.mxu0 0.0
    %1287 = vmatprep.subr.mxu0 0.0
    %1288 = vmatpush1.msra.mxu0 0.0
    %1289 = vmatprep.subr.mxu0 0.0
    %1290 = vmatpush1.msra.mxu0 0.0
    %1291 = vmatprep.subr.mxu0 0.0
    %1292 = vmatpush1.msra.mxu0 0.0
    %1293 = vmatprep.subr.mxu0 0.0
    %1294 = vmatpush1.msra.mxu0 0.0
    %1295 = vmatprep.subr.mxu0 0.0
    %1296 = vmatpush1.msra.mxu0 0.0
    %1297 = vmatprep.subr.mxu0 0.0
    %1298 = vmatpush1.msra.mxu0 0.0
    %1299 = vmatprep.subr.mxu0 0.0
    %1300 = vmatpush1.msra.mxu0 0.0
    %1301 = vmatprep.subr.mxu0 0.0
    %1302 = vmatpush1.msra.mxu0 0.0
    %1303 = vmatprep.subr.mxu0 0.0
    %1304 = vmatpush1.msra.mxu0 0.0
    %1305 = vmatprep.subr.mxu0 0.0
    %1306 = vmatpush1.msra.mxu0 0.0
    %1307 = vmatprep.subr.mxu0 0.0
    %1308 = vmatpush1.msra.mxu0 0.0
    %1309 = vmatprep.subr.mxu0 0.0
    %1310 = vmatpush1.msra.mxu0 0.0
    %1311 = vmatprep.subr.mxu0 0.0
    %1312 = vmatpush1.msra.mxu0 0.0
    %1313 = vmatprep.mubr.f32.mxu0 0.0
    %1314 = vmatmul.mubr.f32.gmra.mrb[0].mxu0 %v1247
    %v1315 = vpop.f32.mrb[0].mxu0
    %v1316 = vadd.f32 %v608, %v1315
    %v1317 = vpop.f32.mrb[0].mxu0
    %1318 = vdwg.mxu0
    %s1319 = scalar_lea.vmem %s4, 8
    %1320 = vst.msk [vmem:[%s1319] sm:$0xff] %vm29, %v1316
    // Predicated region
    $region18: #{tpu_custom_call.1} parent=1 // pred_check
      _
    $region19: #{tpu_custom_call.1} parent=1 // pred_check_branch
      %1322 = sbr.rel (0) target = $region21
    $region20: #{tpu_custom_call.1} parent=1 // pred_region
      _
    $region21: #{tpu_custom_call.1} parent=1 // pred_fallthru
      _
    // Predicated region
    $region22: #{tpu_custom_call.1} parent=1 // pred_check
      _
    $region23: #{tpu_custom_call.1} parent=1 // pred_check_branch
      %1324 = sbr.rel (0) target = $region25
    $region24: #{tpu_custom_call.1} parent=1 // pred_region
      %s1326 = ssub.s32 512, 512
      %1327 = vsyncadd [#allocation3], %s1326
      %s1328 = sshll.u32 [#allocation2], 4
      %s1329 = int_to_ptr.vmem [resolvable:$true] %s1328
      %1334 = dma.vmem_to_hbm [thread:$0]  %s1329, 512, %s5, [#allocation3], 128, 128, 8
    $region25: #{tpu_custom_call.1} parent=1 // pred_fallthru
      _
    // Predicated region
    $region26: #{tpu_custom_call.1} parent=1 // pred_check
      _
    $region27: #{tpu_custom_call.1} parent=1 // pred_check_branch
      %1336 = sbr.rel (0) target = $region29
    $region28: #{tpu_custom_call.1} parent=1 // pred_region
      _
    $region29: #{tpu_custom_call.1} parent=1 // pred_fallthru
      _
    // Predicated region
    $region30: #{tpu_custom_call.1} parent=1 // pred_check
      _
    $region31: #{tpu_custom_call.1} parent=1 // pred_check_branch
      %1338 = sbr.rel (0) target = $region33
    $region32: #{tpu_custom_call.1} parent=1 // pred_region
      %1339 = dma.done [#allocation3], 512
    $region33: #{tpu_custom_call.1} parent=1 // pred_fallthru
      _
    %1340 = vsyncpa [#allocation3], 1

</llo_original>
